<compile_context>
chip_gen: v7x
topology: tpu7x:2x2x1
jax: 0.10.0
libtpu: 0.0.40
codegen_flags: <defaults>
</compile_context>

<pallas_src>
import functools

import jax
import jax.numpy as jnp
from jax.experimental import pallas as pl
from jax.experimental.pallas import tpu as pltpu


# ---------------------------------------------------------------------------
# helpers
# ---------------------------------------------------------------------------
def _round_up(x, m):
    return (x + m - 1) // m * m


def _pick_tile(dim, cap, align):
    """Pad `dim` to a multiple of `align`; pick tile <= cap that divides the padded dim."""
    dp = _round_up(dim, align)
    if dp <= cap:
        return dp, dp
    t = cap - (cap % align)
    while t >= align:
        if dp % t == 0:
            return t, dp
        t -= align
    return align, dp


# ---------------------------------------------------------------------------
# Kernel 1: tiled channel-major conv matmul + folded BN + SiLU
#   out[b, o, m] = silu( scale[o] * sum_k wt[o,k] * pt[b,k,m] + shift[o] )
# ---------------------------------------------------------------------------
def _conv_mm_kernel(wt_ref, pt_ref, scale_ref, shift_ref, o_ref, acc_ref):
    k = pl.program_id(3)

    @pl.when(k == 0)
    def _init():
        acc_ref[...] = jnp.zeros_like(acc_ref)

    acc_ref[...] += jnp.dot(wt_ref[...], pt_ref[0],
                            preferred_element_type=jnp.float32)

    @pl.when(k == pl.num_programs(3) - 1)
    def _finalize():
        y = acc_ref[...] * scale_ref[...] + shift_ref[...]     # folded BN (eval)
        o_ref[0] = (y * jax.nn.sigmoid(y)).astype(o_ref.dtype)  # SiLU


def conv3x3_bn_silu(x_bchw, w_oihw, bn_scale, bn_shift):
    """3x3 'same' conv (stride 1, no bias) + BN + SiLU.
    x_bchw: [B, Cin, H, W] (bf16).  Returns [B, Cout, H*W] bf16."""
    B, Cin, H, W = x_bchw.shape
    Cout = w_oihw.shape[0]
    N = H * W
    K = 9 * Cin

    # im2col, channel-major: pt[b, tap*Cin + c, h*W + w] = xpad[b, c, h+dh, w+dw]
    # TODO(synk): replace im2col materialization with in-kernel halo DMA / tap-walk
    #             to cut the 9x HBM read/write of activations.
    xp = jnp.pad(x_bchw, ((0, 0), (0, 0), (1, 1), (1, 1)))
    taps = [xp[:, :, dh:dh + H, dw:dw + W] for dh in range(3) for dw in range(3)]
    pt = jnp.stack(taps, axis=1).reshape(B, K, N).astype(jnp.bfloat16)

    # weight [Cout,Cin,3,3] -> [Cout, 9*Cin] matching tap*Cin+c ordering
    wt = jnp.transpose(w_oihw, (0, 2, 3, 1)).reshape(Cout, K).astype(jnp.bfloat16)

    # tiles (128-aligned lane dims; Cout only needs sublane (8) alignment)
    tm, Np = _pick_tile(N, 512, 128)
    tk, Kp = _pick_tile(K, 512, 128)
    tn, Cop = _pick_tile(Cout, 256, 8)

    pt = jnp.pad(pt, ((0, 0), (0, Kp - K), (0, Np - N)))
    wt = jnp.pad(wt, ((0, Cop - Cout), (0, Kp - K)))
    scale = jnp.pad(bn_scale.astype(jnp.float32), (0, Cop - Cout)).reshape(Cop, 1)
    shift = jnp.pad(bn_shift.astype(jnp.float32), (0, Cop - Cout)).reshape(Cop, 1)

    out = pl.pallas_call(
        _conv_mm_kernel,
        out_shape=jax.ShapeDtypeStruct((B, Cop, Np), jnp.bfloat16),
        grid_spec=pltpu.PrefetchScalarGridSpec(
            num_scalar_prefetch=0,
            grid=(B, Cop // tn, Np // tm, Kp // tk),
            in_specs=[
                pl.BlockSpec((tn, tk), lambda b, j, i, k: (j, k)),
                pl.BlockSpec((1, tk, tm), lambda b, j, i, k: (b, k, i)),
                pl.BlockSpec((tn, 1), lambda b, j, i, k: (j, 0)),
                pl.BlockSpec((tn, 1), lambda b, j, i, k: (j, 0)),
            ],
            out_specs=pl.BlockSpec((1, tn, tm), lambda b, j, i, k: (b, j, i)),
            scratch_shapes=[pltpu.VMEM((tn, tm), jnp.float32)],
        ),
        compiler_params=pltpu.CompilerParams(
            dimension_semantics=("parallel", "parallel", "parallel", "arbitrary")),
    )(wt, pt, scale, shift)
    return out[:, :Cout, :N]


# ---------------------------------------------------------------------------
# Kernels 2/3: iAFF, channel-major [C, N] tiles, two N-tiled passes
# ---------------------------------------------------------------------------
def _iaff_pass1_kernel(x_ref, r_ref, xg_ref,
                       w1a_ref, b1a_ref, w1b_ref, b1b_ref,
                       xi_ref, xsum_ref):
    n = pl.program_id(1)
    x = x_ref[0].astype(jnp.float32)            # [C, tn]
    r = r_ref[0].astype(jnp.float32)
    xa = (x + r).astype(jnp.bfloat16)

    # local_att (1x1 conv + BN folded, ReLU, 1x1 conv + BN folded)
    h = jnp.dot(w1a_ref[...], xa, preferred_element_type=jnp.float32) + b1a_ref[...]
    h = jnp.maximum(h, 0.0).astype(jnp.bfloat16)
    xl = jnp.dot(w1b_ref[...], h, preferred_element_type=jnp.float32) + b1b_ref[...]

    wei = jax.nn.sigmoid(xl + xg_ref[0])        # xg: [C,1] broadcast over N
    xi = x * wei + r * (1.0 - wei)
    xi_ref[0] = xi.astype(xi_ref.dtype)

    # accumulate per-batch sum(xi) for the second global pooling
    @pl.when(n == 0)
    def _():
        xsum_ref[...] = jnp.zeros_like(xsum_ref)
    xsum_ref[...] += jnp.sum(xi, axis=1, keepdims=True)[None]


def _iaff_pass2_kernel(x_ref, r_ref, xi_ref, xg2_ref,
                       w2a_ref, b2a_ref, w2b_ref, b2b_ref, o_ref):
    x = x_ref[0].astype(jnp.float32)
    r = r_ref[0].astype(jnp.float32)
    xi = xi_ref[0]                              # bf16

    h = jnp.dot(w2a_ref[...], xi, preferred_element_type=jnp.float32) + b2a_ref[...]
    h = jnp.maximum(h, 0.0).astype(jnp.bfloat16)
    xl2 = jnp.dot(w2b_ref[...], h, preferred_element_type=jnp.float32) + b2b_ref[...]

    wei2 = jax.nn.sigmoid(xl2 + xg2_ref[0])
    o_ref[0] = (x * wei2 + r * (1.0 - wei2)).astype(o_ref.dtype)


def _global_mlp(v, p):
    """global_att on pooled [B, C] vectors (tiny; evaluated in JAX, hoisted)."""
    h = jnp.maximum(v @ p["wg1"].T + p["bg1"], 0.0)
    return h @ p["wg2"].T + p["bg2"]


def iaff_apply(x_cn, r_cn, p):
    """x_cn, r_cn: [B, C, N] bf16.  Returns [B, C, N] bf16."""
    B, C, N = x_cn.shape
    tn, Np = _pick_tile(N, 512, 128)
    xpd = jnp.pad(x_cn, ((0, 0), (0, 0), (0, Np - N))).astype(jnp.bfloat16)
    rpd = jnp.pad(r_cn, ((0, 0), (0, 0), (0, Np - N))).astype(jnp.bfloat16)

    # global branch of iteration 1: pool(x + r) -> tiny MLP (JAX glue)
    xa_mean = (x_cn.astype(jnp.float32) + r_cn.astype(jnp.float32)).mean(axis=2)  # [B,C]
    xg = _global_mlp(xa_mean, p)[:, :, None].astype(jnp.float32)                  # [B,C,1]

    grid = (B, Np // tn)
    data_spec = pl.BlockSpec((1, C, tn), lambda b, n: (b, 0, n))
    vec_spec = pl.BlockSpec((1, C, 1), lambda b, n: (b, 0, 0))

    def wspec(a):
        return pl.BlockSpec(a.shape, lambda b, n, _nd=a.ndim: (0,) * _nd)

    w1 = [p["w1a"], p["b1a"], p["w1b"], p["b1b"]]
    xi, xi_sum = pl.pallas_call(
        _iaff_pass1_kernel,
        out_shape=(jax.ShapeDtypeStruct((B, C, Np), jnp.bfloat16),
                   jax.ShapeDtypeStruct((B, C, 1), jnp.float32)),
        grid_spec=pltpu.PrefetchScalarGridSpec(
            num_scalar_prefetch=0, grid=grid,
            in_specs=[data_spec, data_spec, vec_spec] + [wspec(a) for a in w1],
            out_specs=[data_spec, vec_spec]),
        compiler_params=pltpu.CompilerParams(
            dimension_semantics=("parallel", "arbitrary")),
    )(xpd, rpd, xg, *w1)

    # global branch of iteration 2 (PyTorch forward reuses global_att, not global_att2)
    xg2 = _global_mlp(xi_sum[:, :, 0] / jnp.float32(N), p)[:, :, None].astype(jnp.float32)

    w2 = [p["w2a"], p["b2a"], p["w2b"], p["b2b"]]
    out = pl.pallas_call(
        _iaff_pass2_kernel,
        out_shape=jax.ShapeDtypeStruct((B, C, Np), jnp.bfloat16),
        grid_spec=pltpu.PrefetchScalarGridSpec(
            num_scalar_prefetch=0, grid=grid,
            in_specs=[data_spec, data_spec, data_spec, vec_spec] + [wspec(a) for a in w2],
            out_specs=data_spec),
        compiler_params=pltpu.CompilerParams(
            dimension_semantics=("parallel", "parallel")),
    )(xpd, rpd, xi, xg2, *w2)
    return out[:, :, :N]


# ---------------------------------------------------------------------------
# Deterministic parameter construction (synthetic, eval-mode BN folded)
# ---------------------------------------------------------------------------
_BN_EPS = 1e-5


def _bn_fold(key, c):
    k1, k2, k3, k4 = jax.random.split(key, 4)
    gamma = jax.random.uniform(k1, (c,), jnp.float32, 0.5, 1.5)
    beta = 0.1 * jax.random.normal(k2, (c,), jnp.float32)
    mean = 0.1 * jax.random.normal(k3, (c,), jnp.float32)
    var = jax.random.uniform(k4, (c,), jnp.float32, 0.5, 1.5)
    scale = gamma * jax.lax.rsqrt(var + _BN_EPS)
    shift = beta - mean * scale
    return scale, shift


def make_params(c1, c2, e=0.5, seed=0):
    c_ = int(c2 * e)
    ci = c2 // 2                      # iAFF inter_channels (r=2)
    key = jax.random.PRNGKey(seed)
    ks = list(jax.random.split(key, 24))

    def nrm(k, shape):
        return 0.1 * jax.random.normal(k, shape, jnp.float32)

    params = {}
    params["cv1_w"] = nrm(ks[0], (c_, c1, 3, 3))
    params["cv1_scale"], params["cv1_shift"] = _bn_fold(ks[1], c_)
    params["cv2_w"] = nrm(ks[2], (c2, c_, 3, 3))
    params["cv2_scale"], params["cv2_shift"] = _bn_fold(ks[3], c2)

    def conv1x1(kw, kb, cin, cout):
        return nrm(kw, (cout, cin)), nrm(kb, (cout,))

    def conv1x1_bn(kw, kb, kbn, cin, cout):
        w, b = conv1x1(kw, kb, cin, cout)
        s, sh = _bn_fold(kbn, cout)
        wf = (w * s[:, None]).astype(jnp.bfloat16)           # [cout, cin]
        bf = (b * s + sh).reshape(cout, 1).astype(jnp.float32)
        return wf, bf

    iaff = {}
    iaff["w1a"], iaff["b1a"] = conv1x1_bn(ks[4], ks[5], ks[6], c2, ci)
    iaff["w1b"], iaff["b1b"] = conv1x1_bn(ks[7], ks[8], ks[9], ci, c2)
    # global_att: pool, conv(C->Ci)+ReLU, conv(Ci->C)  (no BN in this branch)
    iaff["wg1"], iaff["bg1"] = conv1x1(ks[10], ks[11], c2, ci)
    iaff["wg2"], iaff["bg2"] = conv1x1(ks[12], ks[13], ci, c2)
    iaff["w2a"], iaff["b2a"] = conv1x1_bn(ks[14], ks[15], ks[16], c2, ci)
    iaff["w2b"], iaff["b2b"] = conv1x1_bn(ks[17], ks[18], ks[19], ci, c2)
    # global_att2 exists in __init__ but is never used by iAFF.forward -> not materialized.
    params["iaff"] = iaff
    return params


# ---------------------------------------------------------------------------
# Bottleneck_iAFF forward (NCHW in, NCHW out)
# ---------------------------------------------------------------------------
def bottleneck_iaff_forward(x_nchw, params, shortcut=True):
    B, c1, H, W = x_nchw.shape
    c2 = params["cv2_w"].shape[0]
    c_ = params["cv1_w"].shape[0]
    N = H * W

    x = x_nchw.astype(jnp.bfloat16)
    y1 = conv3x3_bn_silu(x, params["cv1_w"], params["cv1_scale"], params["cv1_shift"])
    y1 = y1.reshape(B, c_, H, W)
    y2 = conv3x3_bn_silu(y1, params["cv2_w"], params["cv2_scale"], params["cv2_shift"])

    if shortcut and (c1 == c2):
        out_cn = iaff_apply(x.reshape(B, c1, N), y2, params["iaff"])
        out = out_cn.reshape(B, c2, H, W)
    else:
        out = y2.reshape(B, c2, H, W)
    return out.astype(jnp.float32)


if __name__ == "__main__":
    B, C, H, W = 2, 4, 16, 16                      # c1 == c2 -> shortcut branch (iAFF) active
    key = jax.random.PRNGKey(0)
    x = jax.random.normal(key, (B, C, H, W), jnp.float32)

    params = make_params(c1=C, c2=C, e=0.5, seed=0)
    fwd = jax.jit(functools.partial(bottleneck_iaff_forward, shortcut=True))
    out = fwd(x, params)
    jax.block_until_ready(out)
    assert out.shape == (B, C, H, W), out.shape
    assert bool(jnp.all(jnp.isfinite(out)))
    print("KERNEL_OK")
</pallas_src>

<mosaic_0001>
module attributes {stable_mosaic.version = 11 : i64} {
  func.func @_conv_mm_kernel(%arg0: i32, %arg1: i32, %arg2: i32, %arg3: i32, %arg4: memref<8x128xbf16, #tpu.memory_space<vmem>>, %arg5: memref<1x128x256xbf16, #tpu.memory_space<vmem>>, %arg6: memref<8x1xf32, #tpu.memory_space<vmem>>, %arg7: memref<8x1xf32, #tpu.memory_space<vmem>>, %arg8: memref<1x8x256xbf16, #tpu.memory_space<vmem>>, %arg9: memref<8x256xf32, #tpu.memory_space<vmem>>) attributes {dimension_semantics = [#tpu.dimension_semantics<parallel>, #tpu.dimension_semantics<parallel>, #tpu.dimension_semantics<parallel>, #tpu.dimension_semantics<arbitrary>], iteration_bounds = array<i64: 2, 1, 1, 1>, scalar_prefetch = 0 : i64, scratch_operands = 1 : i64, tpu.core_type = #tpu.core_type<tc>, window_params = [{transform_indices = @transform_0, window_bounds = array<i64: 8, 128>}, {transform_indices = @transform_1, window_bounds = array<i64: 1, 128, 256>}, {transform_indices = @transform_2, window_bounds = array<i64: 8, 1>}, {transform_indices = @transform_3, window_bounds = array<i64: 8, 1>}, {transform_indices = @transform_4, window_bounds = array<i64: 1, 8, 256>}]} {
    %c0_i32 = arith.constant 0 : i32
    %0 = arith.cmpi eq, %arg3, %c0_i32 : i32
    %1 = arith.extui %0 : i1 to i32
    %c0_i32_0 = arith.constant 0 : i32
    %2 = arith.cmpi ne, %1, %c0_i32_0 : i32
    scf.if %2 {
      %cst_11 = arith.constant 0.000000e+00 : f32
      %13 = vector.broadcast %cst_11 : f32 to vector<8x256xf32>
      %c0_12 = arith.constant 0 : index
      %c0_13 = arith.constant 0 : index
      %14 = vector.load %arg9[%c0_12, %c0_13] : memref<8x256xf32, #tpu.memory_space<vmem>>, vector<8x256xf32>
      tpu.vector_store %arg9[%c0_12, %c0_13], %13 {strides = array<i32>} : memref<8x256xf32, #tpu.memory_space<vmem>>, vector<8x256xf32>,
    } else {
    }
    %c0 = arith.constant 0 : index
    %c0_1 = arith.constant 0 : index
    %3 = vector.load %arg9[%c0, %c0_1] : memref<8x256xf32, #tpu.memory_space<vmem>>, vector<8x256xf32>
    %c0_2 = arith.constant 0 : index
    %c0_3 = arith.constant 0 : index
    %4 = vector.load %arg4[%c0_2, %c0_3] : memref<8x128xbf16, #tpu.memory_space<vmem>>, vector<8x128xbf16>
    %c0_4 = arith.constant 0 : index
    %c0_5 = arith.constant 0 : index
    %c0_6 = arith.constant 0 : index
    %5 = vector.load %arg5[%c0_4, %c0_5, %c0_6] : memref<1x128x256xbf16, #tpu.memory_space<vmem>>, vector<1x128x256xbf16>
    %6 = vector.shape_cast %5 : vector<1x128x256xbf16> to vector<128x256xbf16>
    %cst = arith.constant dense<0.000000e+00> : vector<8x256xf32>
    %7 = tpu.matmul %4, %6, %cst {dimension_numbers = #tpu.dot_dimension_numbers<[1], [0], [0], [1], [0, 0, 1, 1], [], []>} : vector<8x128xbf16>, vector<128x256xbf16>, vector<8x256xf32> -> vector<8x256xf32>
    %8 = arith.addf %3, %7 : vector<8x256xf32>
    %c0_7 = arith.constant 0 : index
    %c0_8 = arith.constant 0 : index
    %9 = vector.load %arg9[%c0_7, %c0_8] : memref<8x256xf32, #tpu.memory_space<vmem>>, vector<8x256xf32>
    tpu.vector_store %arg9[%c0_7, %c0_8], %8 {strides = array<i32>} : memref<8x256xf32, #tpu.memory_space<vmem>>, vector<8x256xf32>,
    %c0_i32_9 = arith.constant 0 : i32
    %10 = arith.cmpi eq, %arg3, %c0_i32_9 : i32
    %11 = arith.extui %10 : i1 to i32
    %c0_i32_10 = arith.constant 0 : i32
    %12 = arith.cmpi ne, %11, %c0_i32_10 : i32
    scf.if %12 {
      %c0_11 = arith.constant 0 : index
      %c0_12 = arith.constant 0 : index
      %13 = vector.load %arg9[%c0_11, %c0_12] : memref<8x256xf32, #tpu.memory_space<vmem>>, vector<8x256xf32>
      %c0_13 = arith.constant 0 : index
      %c0_14 = arith.constant 0 : index
      %14 = vector.load %arg6[%c0_13, %c0_14] : memref<8x1xf32, #tpu.memory_space<vmem>>, vector<8x1xf32>
      %15 = vector.broadcast %14 : vector<8x1xf32> to vector<8x256xf32>
      %16 = arith.mulf %13, %15 : vector<8x256xf32>
      %c0_15 = arith.constant 0 : index
      %c0_16 = arith.constant 0 : index
      %17 = vector.load %arg7[%c0_15, %c0_16] : memref<8x1xf32, #tpu.memory_space<vmem>>, vector<8x1xf32>
      %18 = vector.broadcast %17 : vector<8x1xf32> to vector<8x256xf32>
      %19 = arith.addf %16, %18 : vector<8x256xf32>
      %20 = arith.negf %19 : vector<8x256xf32>
      %21 = math.exp %20 : vector<8x256xf32>
      %cst_17 = arith.constant 1.000000e+00 : f32
      %22 = vector.broadcast %cst_17 : f32 to vector<8x256xf32>
      %23 = arith.addf %22, %21 : vector<8x256xf32>
      %24 = arith.divf %22, %23 : vector<8x256xf32>
      %25 = arith.mulf %19, %24 : vector<8x256xf32>
      %26 = arith.truncf %25 : vector<8x256xf32> to vector<8x256xbf16>
      %c0_18 = arith.constant 0 : index
      %c0_19 = arith.constant 0 : index
      %c0_20 = arith.constant 0 : index
      %27 = vector.load %arg8[%c0_18, %c0_19, %c0_20] : memref<1x8x256xbf16, #tpu.memory_space<vmem>>, vector<1x8x256xbf16>
      %28 = vector.shape_cast %27 : vector<1x8x256xbf16> to vector<8x256xbf16>
      %29 = vector.shape_cast %26 : vector<8x256xbf16> to vector<1x8x256xbf16>
      tpu.vector_store %arg8[%c0_18, %c0_19, %c0_20], %29 {strides = array<i32>} : memref<1x8x256xbf16, #tpu.memory_space<vmem>>, vector<1x8x256xbf16>,
    } else {
    }
    return
  }
  func.func @transform_0(%arg0: i32, %arg1: i32, %arg2: i32, %arg3: i32) -> (i32, i32) {
    %c0_i32 = arith.constant 0 : i32
    return %arg1, %arg3 : i32, i32
  }
  func.func @transform_1(%arg0: i32, %arg1: i32, %arg2: i32, %arg3: i32) -> (i32, i32, i32) {
    %c0_i32 = arith.constant 0 : i32
    return %arg0, %arg3, %arg2 : i32, i32, i32
  }
  func.func @transform_2(%arg0: i32, %arg1: i32, %arg2: i32, %arg3: i32) -> (i32, i32) {
    %c0_i32 = arith.constant 0 : i32
    %c0_i32_0 = arith.constant 0 : i32
    return %arg1, %c0_i32 : i32, i32
  }
  func.func @transform_3(%arg0: i32, %arg1: i32, %arg2: i32, %arg3: i32) -> (i32, i32) {
    %c0_i32 = arith.constant 0 : i32
    %c0_i32_0 = arith.constant 0 : i32
    return %arg1, %c0_i32 : i32, i32
  }
  func.func @transform_4(%arg0: i32, %arg1: i32, %arg2: i32, %arg3: i32) -> (i32, i32, i32) {
    %c0_i32 = arith.constant 0 : i32
    return %arg0, %arg1, %arg2 : i32, i32, i32
  }
}

module attributes {stable_mosaic.version = 11 : i64} {
  func.func @_iaff_pass1_kernel(%arg0: i32, %arg1: i32, %arg2: memref<1x4x256xbf16, #tpu.memory_space<vmem>>, %arg3: memref<1x4x256xbf16, #tpu.memory_space<vmem>>, %arg4: memref<1x4x1xf32, #tpu.memory_space<vmem>>, %arg5: memref<2x4xbf16, #tpu.memory_space<vmem>>, %arg6: memref<2x1xf32, #tpu.memory_space<vmem>>, %arg7: memref<4x2xbf16, #tpu.memory_space<vmem>>, %arg8: memref<4x1xf32, #tpu.memory_space<vmem>>, %arg9: memref<1x4x256xbf16, #tpu.memory_space<vmem>>, %arg10: memref<1x4x1xf32, #tpu.memory_space<vmem>>) attributes {dimension_semantics = [#tpu.dimension_semantics<parallel>, #tpu.dimension_semantics<arbitrary>], iteration_bounds = array<i64: 2, 1>, scalar_prefetch = 0 : i64, scratch_operands = 0 : i64, tpu.core_type = #tpu.core_type<tc>, window_params = [{transform_indices = @transform_0, window_bounds = array<i64: 1, 4, 256>}, {transform_indices = @transform_1, window_bounds = array<i64: 1, 4, 256>}, {transform_indices = @transform_2, window_bounds = array<i64: 1, 4, 1>}, {pipeline_mode = #tpu.pipeline_mode<synchronous>, transform_indices = @transform_3, window_bounds = array<i64: 2, 4>}, {pipeline_mode = #tpu.pipeline_mode<synchronous>, transform_indices = @transform_4, window_bounds = array<i64: 2, 1>}, {pipeline_mode = #tpu.pipeline_mode<synchronous>, transform_indices = @transform_5, window_bounds = array<i64: 4, 2>}, {pipeline_mode = #tpu.pipeline_mode<synchronous>, transform_indices = @transform_6, window_bounds = array<i64: 4, 1>}, {transform_indices = @transform_7, window_bounds = array<i64: 1, 4, 256>}, {transform_indices = @transform_8, window_bounds = array<i64: 1, 4, 1>}]} {
    %c0 = arith.constant 0 : index
    %c0_0 = arith.constant 0 : index
    %c0_1 = arith.constant 0 : index
    %0 = vector.load %arg2[%c0, %c0_0, %c0_1] : memref<1x4x256xbf16, #tpu.memory_space<vmem>>, vector<1x4x256xbf16>
    %1 = vector.shape_cast %0 : vector<1x4x256xbf16> to vector<4x256xbf16>
    %2 = arith.extf %1 : vector<4x256xbf16> to vector<4x256xf32>
    %c0_2 = arith.constant 0 : index
    %c0_3 = arith.constant 0 : index
    %c0_4 = arith.constant 0 : index
    %3 = vector.load %arg3[%c0_2, %c0_3, %c0_4] : memref<1x4x256xbf16, #tpu.memory_space<vmem>>, vector<1x4x256xbf16>
    %4 = vector.shape_cast %3 : vector<1x4x256xbf16> to vector<4x256xbf16>
    %5 = arith.extf %4 : vector<4x256xbf16> to vector<4x256xf32>
    %6 = arith.addf %2, %5 : vector<4x256xf32>
    %7 = arith.truncf %6 : vector<4x256xf32> to vector<4x256xbf16>
    %c0_5 = arith.constant 0 : index
    %c0_6 = arith.constant 0 : index
    %8 = vector.load %arg5[%c0_5, %c0_6] : memref<2x4xbf16, #tpu.memory_space<vmem>>, vector<2x4xbf16>
    %cst = arith.constant dense<0.000000e+00> : vector<2x256xf32>
    %9 = tpu.matmul %8, %7, %cst {dimension_numbers = #tpu.dot_dimension_numbers<[1], [0], [0], [1], [0, 0, 1, 1], [], []>} : vector<2x4xbf16>, vector<4x256xbf16>, vector<2x256xf32> -> vector<2x256xf32>
    %c0_7 = arith.constant 0 : index
    %c0_8 = arith.constant 0 : index
    %10 = vector.load %arg6[%c0_7, %c0_8] : memref<2x1xf32, #tpu.memory_space<vmem>>, vector<2x1xf32>
    %11 = vector.broadcast %10 : vector<2x1xf32> to vector<2x256xf32>
    %12 = arith.addf %9, %11 : vector<2x256xf32>
    %cst_9 = arith.constant 0.000000e+00 : f32
    %13 = vector.broadcast %cst_9 : f32 to vector<2x256xf32>
    %14 = arith.maximumf %12, %13 : vector<2x256xf32>
    %15 = arith.truncf %14 : vector<2x256xf32> to vector<2x256xbf16>
    %c0_10 = arith.constant 0 : index
    %c0_11 = arith.constant 0 : index
    %16 = vector.load %arg7[%c0_10, %c0_11] : memref<4x2xbf16, #tpu.memory_space<vmem>>, vector<4x2xbf16>
    %cst_12 = arith.constant dense<0.000000e+00> : vector<4x256xf32>
    %17 = tpu.matmul %16, %15, %cst_12 {dimension_numbers = #tpu.dot_dimension_numbers<[1], [0], [0], [1], [0, 0, 1, 1], [], []>} : vector<4x2xbf16>, vector<2x256xbf16>, vector<4x256xf32> -> vector<4x256xf32>
    %c0_13 = arith.constant 0 : index
    %c0_14 = arith.constant 0 : index
    %18 = vector.load %arg8[%c0_13, %c0_14] : memref<4x1xf32, #tpu.memory_space<vmem>>, vector<4x1xf32>
    %19 = vector.broadcast %18 : vector<4x1xf32> to vector<4x256xf32>
    %20 = arith.addf %17, %19 : vector<4x256xf32>
    %c0_15 = arith.constant 0 : index
    %c0_16 = arith.constant 0 : index
    %c0_17 = arith.constant 0 : index
    %21 = vector.load %arg4[%c0_15, %c0_16, %c0_17] : memref<1x4x1xf32, #tpu.memory_space<vmem>>, vector<1x4x1xf32>
    %22 = vector.shape_cast %21 : vector<1x4x1xf32> to vector<4x1xf32>
    %23 = vector.broadcast %22 : vector<4x1xf32> to vector<4x256xf32>
    %24 = arith.addf %20, %23 : vector<4x256xf32>
    %25 = arith.negf %24 : vector<4x256xf32>
    %26 = math.exp %25 : vector<4x256xf32>
    %cst_18 = arith.constant 1.000000e+00 : f32
    %27 = vector.broadcast %cst_18 : f32 to vector<4x256xf32>
    %28 = arith.addf %27, %26 : vector<4x256xf32>
    %29 = arith.divf %27, %28 : vector<4x256xf32>
    %30 = arith.mulf %2, %29 : vector<4x256xf32>
    %cst_19 = arith.constant 1.000000e+00 : f32
    %31 = vector.broadcast %cst_19 : f32 to vector<4x256xf32>
    %32 = arith.subf %31, %29 : vector<4x256xf32>
    %33 = arith.mulf %5, %32 : vector<4x256xf32>
    %34 = arith.addf %30, %33 : vector<4x256xf32>
    %35 = arith.truncf %34 : vector<4x256xf32> to vector<4x256xbf16>
    %c0_20 = arith.constant 0 : index
    %c0_21 = arith.constant 0 : index
    %c0_22 = arith.constant 0 : index
    %36 = vector.load %arg9[%c0_20, %c0_21, %c0_22] : memref<1x4x256xbf16, #tpu.memory_space<vmem>>, vector<1x4x256xbf16>
    %37 = vector.shape_cast %36 : vector<1x4x256xbf16> to vector<4x256xbf16>
    %38 = vector.shape_cast %35 : vector<4x256xbf16> to vector<1x4x256xbf16>
    tpu.vector_store %arg9[%c0_20, %c0_21, %c0_22], %38 {strides = array<i32>} : memref<1x4x256xbf16, #tpu.memory_space<vmem>>, vector<1x4x256xbf16>,
    %c0_i32 = arith.constant 0 : i32
    %39 = arith.cmpi eq, %arg1, %c0_i32 : i32
    %40 = arith.extui %39 : i1 to i32
    %c0_i32_23 = arith.constant 0 : i32
    %41 = arith.cmpi ne, %40, %c0_i32_23 : i32
    scf.if %41 {
      %cst_31 = arith.constant 0.000000e+00 : f32
      %48 = vector.broadcast %cst_31 : f32 to vector<1x4x1xf32>
      %c0_32 = arith.constant 0 : index
      %c0_33 = arith.constant 0 : index
      %c0_34 = arith.constant 0 : index
      %49 = vector.load %arg10[%c0_32, %c0_33, %c0_34] : memref<1x4x1xf32, #tpu.memory_space<vmem>>, vector<1x4x1xf32>
      tpu.vector_store %arg10[%c0_32, %c0_33, %c0_34], %48 {strides = array<i32>} : memref<1x4x1xf32, #tpu.memory_space<vmem>>, vector<1x4x1xf32>,
    } else {
    }
    %c0_24 = arith.constant 0 : index
    %c0_25 = arith.constant 0 : index
    %c0_26 = arith.constant 0 : index
    %42 = vector.load %arg10[%c0_24, %c0_25, %c0_26] : memref<1x4x1xf32, #tpu.memory_space<vmem>>, vector<1x4x1xf32>
    %cst_27 = arith.constant dense<0.000000e+00> : vector<4xf32>
    %43 = vector.multi_reduction <add>, %34, %cst_27 [1] : vector<4x256xf32> to vector<4xf32>
    %44 = vector.shape_cast %43 : vector<4xf32> to vector<4x1xf32>
    %45 = vector.shape_cast %44 : vector<4x1xf32> to vector<1x4x1xf32>
    %46 = arith.addf %42, %45 : vector<1x4x1xf32>
    %c0_28 = arith.constant 0 : index
    %c0_29 = arith.constant 0 : index
    %c0_30 = arith.constant 0 : index
    %47 = vector.load %arg10[%c0_28, %c0_29, %c0_30] : memref<1x4x1xf32, #tpu.memory_space<vmem>>, vector<1x4x1xf32>
    tpu.vector_store %arg10[%c0_28, %c0_29, %c0_30], %46 {strides = array<i32>} : memref<1x4x1xf32, #tpu.memory_space<vmem>>, vector<1x4x1xf32>,
    return
  }
  func.func @transform_0(%arg0: i32, %arg1: i32) -> (i32, i32, i32) {
    %c0_i32 = arith.constant 0 : i32
    %c0_i32_0 = arith.constant 0 : i32
    return %arg0, %c0_i32, %arg1 : i32, i32, i32
  }
  func.func @transform_1(%arg0: i32, %arg1: i32) -> (i32, i32, i32) {
    %c0_i32 = arith.constant 0 : i32
    %c0_i32_0 = arith.constant 0 : i32
    return %arg0, %c0_i32, %arg1 : i32, i32, i32
  }
  func.func @transform_2(%arg0: i32, %arg1: i32) -> (i32, i32, i32) {
    %c0_i32 = arith.constant 0 : i32
    %c0_i32_0 = arith.constant 0 : i32
    %c0_i32_1 = arith.constant 0 : i32
    return %arg0, %c0_i32, %c0_i32_0 : i32, i32, i32
  }
  func.func @transform_3(%arg0: i32, %arg1: i32) -> (i32, i32) {
    %c0_i32 = arith.constant 0 : i32
    %c0_i32_0 = arith.constant 0 : i32
    %c0_i32_1 = arith.constant 0 : i32
    return %c0_i32, %c0_i32_0 : i32, i32
  }
  func.func @transform_4(%arg0: i32, %arg1: i32) -> (i32, i32) {
    %c0_i32 = arith.constant 0 : i32
    %c0_i32_0 = arith.constant 0 : i32
    %c0_i32_1 = arith.constant 0 : i32
    return %c0_i32, %c0_i32_0 : i32, i32
  }
  func.func @transform_5(%arg0: i32, %arg1: i32) -> (i32, i32) {
    %c0_i32 = arith.constant 0 : i32
    %c0_i32_0 = arith.constant 0 : i32
    %c0_i32_1 = arith.constant 0 : i32
    return %c0_i32, %c0_i32_0 : i32, i32
  }
  func.func @transform_6(%arg0: i32, %arg1: i32) -> (i32, i32) {
    %c0_i32 = arith.constant 0 : i32
    %c0_i32_0 = arith.constant 0 : i32
    %c0_i32_1 = arith.constant 0 : i32
    return %c0_i32, %c0_i32_0 : i32, i32
  }
  func.func @transform_7(%arg0: i32, %arg1: i32) -> (i32, i32, i32) {
    %c0_i32 = arith.constant 0 : i32
    %c0_i32_0 = arith.constant 0 : i32
    return %arg0, %c0_i32, %arg1 : i32, i32, i32
  }
  func.func @transform_8(%arg0: i32, %arg1: i32) -> (i32, i32, i32) {
    %c0_i32 = arith.constant 0 : i32
    %c0_i32_0 = arith.constant 0 : i32
    %c0_i32_1 = arith.constant 0 : i32
    return %arg0, %c0_i32, %c0_i32_0 : i32, i32, i32
  }
}

module attributes {stable_mosaic.version = 11 : i64} {
  func.func @_iaff_pass2_kernel(%arg0: i32, %arg1: i32, %arg2: memref<1x4x256xbf16, #tpu.memory_space<vmem>>, %arg3: memref<1x4x256xbf16, #tpu.memory_space<vmem>>, %arg4: memref<1x4x256xbf16, #tpu.memory_space<vmem>>, %arg5: memref<1x4x1xf32, #tpu.memory_space<vmem>>, %arg6: memref<2x4xbf16, #tpu.memory_space<vmem>>, %arg7: memref<2x1xf32, #tpu.memory_space<vmem>>, %arg8: memref<4x2xbf16, #tpu.memory_space<vmem>>, %arg9: memref<4x1xf32, #tpu.memory_space<vmem>>, %arg10: memref<1x4x256xbf16, #tpu.memory_space<vmem>>) attributes {dimension_semantics = [#tpu.dimension_semantics<parallel>, #tpu.dimension_semantics<parallel>], iteration_bounds = array<i64: 2, 1>, scalar_prefetch = 0 : i64, scratch_operands = 0 : i64, tpu.core_type = #tpu.core_type<tc>, window_params = [{transform_indices = @transform_0, window_bounds = array<i64: 1, 4, 256>}, {transform_indices = @transform_1, window_bounds = array<i64: 1, 4, 256>}, {transform_indices = @transform_2, window_bounds = array<i64: 1, 4, 256>}, {transform_indices = @transform_3, window_bounds = array<i64: 1, 4, 1>}, {pipeline_mode = #tpu.pipeline_mode<synchronous>, transform_indices = @transform_4, window_bounds = array<i64: 2, 4>}, {pipeline_mode = #tpu.pipeline_mode<synchronous>, transform_indices = @transform_5, window_bounds = array<i64: 2, 1>}, {pipeline_mode = #tpu.pipeline_mode<synchronous>, transform_indices = @transform_6, window_bounds = array<i64: 4, 2>}, {pipeline_mode = #tpu.pipeline_mode<synchronous>, transform_indices = @transform_7, window_bounds = array<i64: 4, 1>}, {transform_indices = @transform_8, window_bounds = array<i64: 1, 4, 256>}]} {
    %c0 = arith.constant 0 : index
    %c0_0 = arith.constant 0 : index
    %c0_1 = arith.constant 0 : index
    %0 = vector.load %arg2[%c0, %c0_0, %c0_1] : memref<1x4x256xbf16, #tpu.memory_space<vmem>>, vector<1x4x256xbf16>
    %1 = vector.shape_cast %0 : vector<1x4x256xbf16> to vector<4x256xbf16>
    %2 = arith.extf %1 : vector<4x256xbf16> to vector<4x256xf32>
    %c0_2 = arith.constant 0 : index
    %c0_3 = arith.constant 0 : index
    %c0_4 = arith.constant 0 : index
    %3 = vector.load %arg3[%c0_2, %c0_3, %c0_4] : memref<1x4x256xbf16, #tpu.memory_space<vmem>>, vector<1x4x256xbf16>
    %4 = vector.shape_cast %3 : vector<1x4x256xbf16> to vector<4x256xbf16>
    %5 = arith.extf %4 : vector<4x256xbf16> to vector<4x256xf32>
    %c0_5 = arith.constant 0 : index
    %c0_6 = arith.constant 0 : index
    %c0_7 = arith.constant 0 : index
    %6 = vector.load %arg4[%c0_5, %c0_6, %c0_7] : memref<1x4x256xbf16, #tpu.memory_space<vmem>>, vector<1x4x256xbf16>
    %7 = vector.shape_cast %6 : vector<1x4x256xbf16> to vector<4x256xbf16>
    %c0_8 = arith.constant 0 : index
    %c0_9 = arith.constant 0 : index
    %8 = vector.load %arg6[%c0_8, %c0_9] : memref<2x4xbf16, #tpu.memory_space<vmem>>, vector<2x4xbf16>
    %cst = arith.constant dense<0.000000e+00> : vector<2x256xf32>
    %9 = tpu.matmul %8, %7, %cst {dimension_numbers = #tpu.dot_dimension_numbers<[1], [0], [0], [1], [0, 0, 1, 1], [], []>} : vector<2x4xbf16>, vector<4x256xbf16>, vector<2x256xf32> -> vector<2x256xf32>
    %c0_10 = arith.constant 0 : index
    %c0_11 = arith.constant 0 : index
    %10 = vector.load %arg7[%c0_10, %c0_11] : memref<2x1xf32, #tpu.memory_space<vmem>>, vector<2x1xf32>
    %11 = vector.broadcast %10 : vector<2x1xf32> to vector<2x256xf32>
    %12 = arith.addf %9, %11 : vector<2x256xf32>
    %cst_12 = arith.constant 0.000000e+00 : f32
    %13 = vector.broadcast %cst_12 : f32 to vector<2x256xf32>
    %14 = arith.maximumf %12, %13 : vector<2x256xf32>
    %15 = arith.truncf %14 : vector<2x256xf32> to vector<2x256xbf16>
    %c0_13 = arith.constant 0 : index
    %c0_14 = arith.constant 0 : index
    %16 = vector.load %arg8[%c0_13, %c0_14] : memref<4x2xbf16, #tpu.memory_space<vmem>>, vector<4x2xbf16>
    %cst_15 = arith.constant dense<0.000000e+00> : vector<4x256xf32>
    %17 = tpu.matmul %16, %15, %cst_15 {dimension_numbers = #tpu.dot_dimension_numbers<[1], [0], [0], [1], [0, 0, 1, 1], [], []>} : vector<4x2xbf16>, vector<2x256xbf16>, vector<4x256xf32> -> vector<4x256xf32>
    %c0_16 = arith.constant 0 : index
    %c0_17 = arith.constant 0 : index
    %18 = vector.load %arg9[%c0_16, %c0_17] : memref<4x1xf32, #tpu.memory_space<vmem>>, vector<4x1xf32>
    %19 = vector.broadcast %18 : vector<4x1xf32> to vector<4x256xf32>
    %20 = arith.addf %17, %19 : vector<4x256xf32>
    %c0_18 = arith.constant 0 : index
    %c0_19 = arith.constant 0 : index
    %c0_20 = arith.constant 0 : index
    %21 = vector.load %arg5[%c0_18, %c0_19, %c0_20] : memref<1x4x1xf32, #tpu.memory_space<vmem>>, vector<1x4x1xf32>
    %22 = vector.shape_cast %21 : vector<1x4x1xf32> to vector<4x1xf32>
    %23 = vector.broadcast %22 : vector<4x1xf32> to vector<4x256xf32>
    %24 = arith.addf %20, %23 : vector<4x256xf32>
    %25 = arith.negf %24 : vector<4x256xf32>
    %26 = math.exp %25 : vector<4x256xf32>
    %cst_21 = arith.constant 1.000000e+00 : f32
    %27 = vector.broadcast %cst_21 : f32 to vector<4x256xf32>
    %28 = arith.addf %27, %26 : vector<4x256xf32>
    %29 = arith.divf %27, %28 : vector<4x256xf32>
    %30 = arith.mulf %2, %29 : vector<4x256xf32>
    %cst_22 = arith.constant 1.000000e+00 : f32
    %31 = vector.broadcast %cst_22 : f32 to vector<4x256xf32>
    %32 = arith.subf %31, %29 : vector<4x256xf32>
    %33 = arith.mulf %5, %32 : vector<4x256xf32>
    %34 = arith.addf %30, %33 : vector<4x256xf32>
    %35 = arith.truncf %34 : vector<4x256xf32> to vector<4x256xbf16>
    %c0_23 = arith.constant 0 : index
    %c0_24 = arith.constant 0 : index
    %c0_25 = arith.constant 0 : index
    %36 = vector.load %arg10[%c0_23, %c0_24, %c0_25] : memref<1x4x256xbf16, #tpu.memory_space<vmem>>, vector<1x4x256xbf16>
    %37 = vector.shape_cast %36 : vector<1x4x256xbf16> to vector<4x256xbf16>
    %38 = vector.shape_cast %35 : vector<4x256xbf16> to vector<1x4x256xbf16>
    tpu.vector_store %arg10[%c0_23, %c0_24, %c0_25], %38 {strides = array<i32>} : memref<1x4x256xbf16, #tpu.memory_space<vmem>>, vector<1x4x256xbf16>,
    return
  }
  func.func @transform_0(%arg0: i32, %arg1: i32) -> (i32, i32, i32) {
    %c0_i32 = arith.constant 0 : i32
    %c0_i32_0 = arith.constant 0 : i32
    return %arg0, %c0_i32, %arg1 : i32, i32, i32
  }
  func.func @transform_1(%arg0: i32, %arg1: i32) -> (i32, i32, i32) {
    %c0_i32 = arith.constant 0 : i32
    %c0_i32_0 = arith.constant 0 : i32
    return %arg0, %c0_i32, %arg1 : i32, i32, i32
  }
  func.func @transform_2(%arg0: i32, %arg1: i32) -> (i32, i32, i32) {
    %c0_i32 = arith.constant 0 : i32
    %c0_i32_0 = arith.constant 0 : i32
    return %arg0, %c0_i32, %arg1 : i32, i32, i32
  }
  func.func @transform_3(%arg0: i32, %arg1: i32) -> (i32, i32, i32) {
    %c0_i32 = arith.constant 0 : i32
    %c0_i32_0 = arith.constant 0 : i32
    %c0_i32_1 = arith.constant 0 : i32
    return %arg0, %c0_i32, %c0_i32_0 : i32, i32, i32
  }
  func.func @transform_4(%arg0: i32, %arg1: i32) -> (i32, i32) {
    %c0_i32 = arith.constant 0 : i32
    %c0_i32_0 = arith.constant 0 : i32
    %c0_i32_1 = arith.constant 0 : i32
    return %c0_i32, %c0_i32_0 : i32, i32
  }
  func.func @transform_5(%arg0: i32, %arg1: i32) -> (i32, i32) {
    %c0_i32 = arith.constant 0 : i32
    %c0_i32_0 = arith.constant 0 : i32
    %c0_i32_1 = arith.constant 0 : i32
    return %c0_i32, %c0_i32_0 : i32, i32
  }
  func.func @transform_6(%arg0: i32, %arg1: i32) -> (i32, i32) {
    %c0_i32 = arith.constant 0 : i32
    %c0_i32_0 = arith.constant 0 : i32
    %c0_i32_1 = arith.constant 0 : i32
    return %c0_i32, %c0_i32_0 : i32, i32
  }
  func.func @transform_7(%arg0: i32, %arg1: i32) -> (i32, i32) {
    %c0_i32 = arith.constant 0 : i32
    %c0_i32_0 = arith.constant 0 : i32
    %c0_i32_1 = arith.constant 0 : i32
    return %c0_i32, %c0_i32_0 : i32, i32
  }
  func.func @transform_8(%arg0: i32, %arg1: i32) -> (i32, i32, i32) {
    %c0_i32 = arith.constant 0 : i32
    %c0_i32_0 = arith.constant 0 : i32
    return %arg0, %c0_i32, %arg1 : i32, i32, i32
  }
}

</mosaic_0001>

<llo_original>
// kernel: bottleneck_iaff_forward.4
$region0: #{bottleneck_iaff_forward.4}
  #allocation0 [shape = 'u32[]', space=smem, size = 0x4, offset = 0x4, fixed_abs, tag = 'smem constant byte address 0x4 - core index']
  #allocation1 [shape = 'u32[144,128]{1,0:T(1,128)}', space=vmem, size = 0x12000, scoped, tag = 'internal scratch']
  #allocation2 [shape = 'f32[8,256]{1,0:T(8,128)}', space=vmem, size = 0x2000, scoped, tag = 'scratch operand']
  %s0 = inlined_call_operand.vmem [shape: bf16[8,128], index: 0, kind: input, shape index: {}]
  %s1 = inlined_call_operand.vmem [shape: bf16[2,128,256], index: 1, kind: input, shape index: {}]
  %s2 = inlined_call_operand.vmem [shape: f32[8,1], index: 2, kind: input, shape index: {}]
  %s3 = inlined_call_operand.vmem [shape: f32[8,1], index: 3, kind: input, shape index: {}]
  %s4 = inlined_call_operand.vmem [shape: bf16[2,8,256], index: 4, kind: output, shape index: {}]
  %s5 = sld [smem:[#allocation0]]
  $region57: #{bottleneck_iaff_forward.4} parent=0
    _
  %s7 = ssub.s32 1, %s5
  %s8 = scalar_select 0, %s7, %s5
  loop: start=0, step=1, limit=4
  $region2: #{bottleneck_iaff_forward.4} parent=0 // loop_pre_header
    _
  $region3: #{bottleneck_iaff_forward.4} parent=0 // loop_header
    %s10 = sphi 0, %s14
    %p11 = scmp.ge.s32.totalorder %s10, 4
    %s17 = sphi 0, %s43
    %s18 = sphi 0, %s39
    %s19 = sphi 0, %s35
    %s20 = sphi 0, %s31
    %s21 = sphi 0, %s17
    %s22 = sphi 0, %s18
    %s23 = sphi 0, %s19
    %s24 = sphi 0, %s20
    %s25 = sphi 0, %s21
    %s26 = sphi 0, %s22
    %s27 = sphi 0, %s23
    %s28 = sphi 0, %s24
    %s48 = sphi 0, %s50
    %s51 = sphi 0, %s48
    %s52 = sphi 0, %s51
    %s68 = sphi 0, %s52
    %s78 = sphi 0, %s80
    %s81 = sphi 0, %s78
    %s82 = sphi 0, %s81
    %s98 = sphi 0, %s82
    %s104 = sphi 0, %s106
    %s107 = sphi 0, %s104
    %s108 = sphi 0, %s107
    %s124 = sphi 0, %s108
    %s130 = sphi 0, %s132
    %s133 = sphi 0, %s130
    %s134 = sphi 0, %s133
    %s150 = sphi 0, %s134
    %s160 = sphi 0, %s162
    %s163 = sphi 0, %s160
    %s164 = sphi 0, %s163
    %s180 = sphi 0, %s164
  $region4: #{bottleneck_iaff_forward.4} parent=0 // loop_header_branch
    %13 = sbr.rel (%p11) target = $region8
  $region5: #{bottleneck_iaff_forward.4} parent=0 // loop_body
    %s15 = ssub.s32 %s10, 1
    %s16 = ssub.s32 %s10, 2
    %s29 = sadd.s32 1, %s20
    %p30 = scmp.ge.s32.totalorder %s29, 1
    %s31 = scalar_select %p30, 0, %s29
    %s32 = sadd.s32 1, %s19
    %s33 = scalar_select %p30, %s32, %s19
    %p34 = scmp.ge.s32.totalorder %s33, 1
    %s35 = scalar_select %p34, 0, %s33
    %s36 = sadd.s32 1, %s18
    %s37 = scalar_select %p34, %s36, %s18
    %p38 = scmp.ge.s32.totalorder %s37, 1
    %s39 = scalar_select %p38, 0, %s37
    %s40 = sadd.s32 1, %s17
    %s41 = scalar_select %p38, %s40, %s17
    %p42 = scmp.ge.s32.totalorder %s41, 2
    %s43 = scalar_select %p42, 0, %s41
    %s44 = ssub.s32 %s18, %s39
    %s45 = ssub.s32 %s20, %s31
    %s46 = sor.u32 %s44, %s45
    %p47 = scmp.eq.s32.totalorder %s46, 0
    %s49 = sadd.s32 %s48, 1
    %s50 = scalar_select %p47, %s48, %s49
    %p53 = pneg %p47
    %p54 = scmp.eq.s32.totalorder %s10, 1
    %p55 = por %p53, %p54
    %p56 = scmp.ne.s32.totalorder %s48, %s51
    %p57 = scmp.eq.s32.totalorder %s10, 0
    %p58 = por %p56, %p57
    %p59 = scmp.ne.s32.totalorder %s48, %s51
    %p60 = scmp.eq.s32.totalorder %s15, 1
    %p61 = por %p59, %p60
    %p62 = scmp.ne.s32.totalorder %s51, %s52
    %p63 = scmp.eq.s32.totalorder %s15, 0
    %p64 = por %p62, %p63
    %p65 = scmp.ne.s32.totalorder %s51, %s52
    %p66 = scmp.eq.s32.totalorder %s16, 1
    %p67 = por %p65, %p66
    %p69 = scmp.ne.s32.totalorder %s52, %s68
    %p70 = scmp.eq.s32.totalorder %s16, 0
    %p71 = por %p69, %p70
    %s72 = ssub.s32 %s17, %s43
    %s73 = ssub.s32 %s20, %s31
    %s74 = sor.u32 %s72, %s73
    %s75 = ssub.s32 %s19, %s35
    %s76 = sor.u32 %s74, %s75
    %p77 = scmp.eq.s32.totalorder %s76, 0
    %s79 = sadd.s32 %s78, 1
    %s80 = scalar_select %p77, %s78, %s79
    %p83 = pneg %p77
    %p84 = scmp.eq.s32.totalorder %s10, 1
    %p85 = por %p83, %p84
    %p86 = scmp.ne.s32.totalorder %s78, %s81
    %p87 = scmp.eq.s32.totalorder %s10, 0
    %p88 = por %p86, %p87
    %p89 = scmp.ne.s32.totalorder %s78, %s81
    %p90 = scmp.eq.s32.totalorder %s15, 1
    %p91 = por %p89, %p90
    %p92 = scmp.ne.s32.totalorder %s81, %s82
    %p93 = scmp.eq.s32.totalorder %s15, 0
    %p94 = por %p92, %p93
    %p95 = scmp.ne.s32.totalorder %s81, %s82
    %p96 = scmp.eq.s32.totalorder %s16, 1
    %p97 = por %p95, %p96
    %p99 = scmp.ne.s32.totalorder %s82, %s98
    %p100 = scmp.eq.s32.totalorder %s16, 0
    %p101 = por %p99, %p100
    %s102 = ssub.s32 %s18, %s39
    %p103 = scmp.eq.s32.totalorder %s102, 0
    %s105 = sadd.s32 %s104, 1
    %s106 = scalar_select %p103, %s104, %s105
    %p109 = pneg %p103
    %p110 = scmp.eq.s32.totalorder %s10, 1
    %p111 = por %p109, %p110
    %p112 = scmp.ne.s32.totalorder %s104, %s107
    %p113 = scmp.eq.s32.totalorder %s10, 0
    %p114 = por %p112, %p113
    %p115 = scmp.ne.s32.totalorder %s104, %s107
    %p116 = scmp.eq.s32.totalorder %s15, 1
    %p117 = por %p115, %p116
    %p118 = scmp.ne.s32.totalorder %s107, %s108
    %p119 = scmp.eq.s32.totalorder %s15, 0
    %p120 = por %p118, %p119
    %p121 = scmp.ne.s32.totalorder %s107, %s108
    %p122 = scmp.eq.s32.totalorder %s16, 1
    %p123 = por %p121, %p122
    %p125 = scmp.ne.s32.totalorder %s108, %s124
    %p126 = scmp.eq.s32.totalorder %s16, 0
    %p127 = por %p125, %p126
    %s128 = ssub.s32 %s18, %s39
    %p129 = scmp.eq.s32.totalorder %s128, 0
    %s131 = sadd.s32 %s130, 1
    %s132 = scalar_select %p129, %s130, %s131
    %p135 = pneg %p129
    %p136 = scmp.eq.s32.totalorder %s10, 1
    %p137 = por %p135, %p136
    %p138 = scmp.ne.s32.totalorder %s130, %s133
    %p139 = scmp.eq.s32.totalorder %s10, 0
    %p140 = por %p138, %p139
    %p141 = scmp.ne.s32.totalorder %s130, %s133
    %p142 = scmp.eq.s32.totalorder %s15, 1
    %p143 = por %p141, %p142
    %p144 = scmp.ne.s32.totalorder %s133, %s134
    %p145 = scmp.eq.s32.totalorder %s15, 0
    %p146 = por %p144, %p145
    %p147 = scmp.ne.s32.totalorder %s133, %s134
    %p148 = scmp.eq.s32.totalorder %s16, 1
    %p149 = por %p147, %p148
    %p151 = scmp.ne.s32.totalorder %s134, %s150
    %p152 = scmp.eq.s32.totalorder %s16, 0
    %p153 = por %p151, %p152
    %s154 = ssub.s32 %s17, %s43
    %s155 = ssub.s32 %s18, %s39
    %s156 = sor.u32 %s154, %s155
    %s157 = ssub.s32 %s19, %s35
    %s158 = sor.u32 %s156, %s157
    %p159 = scmp.eq.s32.totalorder %s158, 0
    %s161 = sadd.s32 %s160, 1
    %s162 = scalar_select %p159, %s160, %s161
    %p165 = pneg %p159
    %p166 = scmp.eq.s32.totalorder %s10, 1
    %p167 = por %p165, %p166
    %p168 = scmp.ne.s32.totalorder %s160, %s163
    %p169 = scmp.eq.s32.totalorder %s10, 0
    %p170 = por %p168, %p169
    %p171 = scmp.ne.s32.totalorder %s160, %s163
    %p172 = scmp.eq.s32.totalorder %s15, 1
    %p173 = por %p171, %p172
    %p174 = scmp.ne.s32.totalorder %s163, %s164
    %p175 = scmp.eq.s32.totalorder %s15, 0
    %p176 = por %p174, %p175
    %p177 = scmp.ne.s32.totalorder %s163, %s164
    %p178 = scmp.eq.s32.totalorder %s16, 1
    %p179 = por %p177, %p178
    %p181 = scmp.ne.s32.totalorder %s164, %s180
    %p182 = scmp.eq.s32.totalorder %s16, 0
    %p183 = por %p181, %p182
    %p184 = scmp.le.s32.totalorder 1, %s10
    %p185 = scmp.lt.s32.totalorder %s10, 3
    %p186 = pnand %p184, %p185
    %p187 = pneg %p186
    // Predicated region
    $region9: #{bottleneck_iaff_forward.4} parent=5 // pred_check
      _
    $region10: #{bottleneck_iaff_forward.4} parent=5 // pred_check_branch
      %189 = sbr.rel (%p186) target = $region12
    $region11: #{bottleneck_iaff_forward.4} parent=5 // pred_region
      %s190 = ssub.s32 %s10, 1
      // Predicated region
      $region13: #{bottleneck_iaff_forward.4} parent=11 // pred_check
        %p191 = pneg %p64
      $region14: #{bottleneck_iaff_forward.4} parent=11 // pred_check_branch
        %193 = sbr.rel (%p191) target = $region16
      $region15: #{bottleneck_iaff_forward.4} parent=11 // pred_region
        %p194 = scmp.lt.s32.totalorder %s22, 0
        %s195 = scalar_select %p194, %s22, 0
        %p196 = scmp.lt.s32.totalorder %s24, 0
        %s197 = scalar_select %p196, %s24, 0
        %s198 = sadd.s32 %s197, %s195
        %s199 = smul.addr %s198, 4
        %s200 = scalar_lea.vmem %s0, %s199
      $region16: #{bottleneck_iaff_forward.4} parent=11 // pred_fallthru
        _
      // Predicated region
      $region17: #{bottleneck_iaff_forward.4} parent=11 // pred_check
        %p201 = pneg %p120
      $region18: #{bottleneck_iaff_forward.4} parent=11 // pred_check_branch
        %203 = sbr.rel (%p201) target = $region20
      $region19: #{bottleneck_iaff_forward.4} parent=11 // pred_region
        %p204 = scmp.lt.s32.totalorder %s22, 0
        %s205 = scalar_select %p204, %s22, 0
        %s206 = smul.addr %s205, 8
        %s207 = scalar_lea.vmem %s2, %s206
      $region20: #{bottleneck_iaff_forward.4} parent=11 // pred_fallthru
        _
      // Predicated region
      $region21: #{bottleneck_iaff_forward.4} parent=11 // pred_check
        %p208 = pneg %p146
      $region22: #{bottleneck_iaff_forward.4} parent=11 // pred_check_branch
        %210 = sbr.rel (%p208) target = $region24
      $region23: #{bottleneck_iaff_forward.4} parent=11 // pred_region
        %p211 = scmp.lt.s32.totalorder %s22, 0
        %s212 = scalar_select %p211, %s22, 0
        %s213 = smul.addr %s212, 8
        %s214 = scalar_lea.vmem %s3, %s213
      $region24: #{bottleneck_iaff_forward.4} parent=11 // pred_fallthru
        _
    $region12: #{bottleneck_iaff_forward.4} parent=5 // pred_fallthru
      _
    %p215 = scmp.lt.s32.totalorder %s10, 2
    // Predicated region
    $region25: #{bottleneck_iaff_forward.4} parent=5 // pred_check
      %p216 = pneg %p215
    $region26: #{bottleneck_iaff_forward.4} parent=5 // pred_check_branch
      %218 = sbr.rel (%p216) target = $region28
    $region27: #{bottleneck_iaff_forward.4} parent=5 // pred_region
      // Predicated region
      $region29: #{bottleneck_iaff_forward.4} parent=27 // pred_check
        %p219 = pneg %p88
      $region30: #{bottleneck_iaff_forward.4} parent=27 // pred_check_branch
        %221 = sbr.rel (%p219) target = $region32
      $region31: #{bottleneck_iaff_forward.4} parent=27 // pred_region
        %s222 = smul.u32 16, %s20
        %s223 = smul.u32 2, %s19
        %p224 = scmp.lt.s32.totalorder %s17, 1
        %s225 = scalar_select %p224, %s17, 1
        %p226 = scmp.lt.s32.totalorder %s222, 15
        %s227 = scalar_select %p226, %s222, 15
        %p228 = scmp.lt.s32.totalorder %s223, 1
        %s229 = scalar_select %p228, %s223, 1
        %s230 = smul.addr %s227, 2
        %s231 = sadd.s32 %s229, %s230
        %s232 = smul.addr %s225, 32
        %s233 = sadd.s32 %s231, %s232
        %s234 = smul.addr %s233, 4
        %s235 = scalar_lea.vmem %s1, %s234
        %s236 = smul.u32 16, %s20
        %s237 = smul.u32 2, %s19
      $region32: #{bottleneck_iaff_forward.4} parent=27 // pred_fallthru
        _
    $region28: #{bottleneck_iaff_forward.4} parent=5 // pred_fallthru
      _
    %p238 = scmp.le.s32.totalorder 1, %s10
    %p239 = scmp.lt.s32.totalorder %s10, 3
    %p240 = pnand %p238, %p239
    %p241 = pneg %p240
    // Predicated region
    $region33: #{bottleneck_iaff_forward.4} parent=5 // pred_check
      _
    $region34: #{bottleneck_iaff_forward.4} parent=5 // pred_check_branch
      %243 = sbr.rel (%p240) target = $region36
    $region35: #{bottleneck_iaff_forward.4} parent=5 // pred_region
      %s244 = ssub.s32 %s10, 1
      %p245 = scmp.lt.s32.totalorder %s22, 0
      %s246 = scalar_select %p245, %s22, 0
      %p247 = scmp.lt.s32.totalorder %s24, 0
      %s248 = scalar_select %p247, %s24, 0
      %s249 = sadd.s32 %s248, %s246
      %s250 = smul.addr %s249, 4
      %s251 = scalar_lea.vmem %s0, %s250
      %p252 = pneg %p64
      %p253 = pneg %p61
      %s254 = smul.u32 16, %s24
      %s255 = smul.u32 2, %s23
      %p256 = scmp.lt.s32.totalorder %s21, 1
      %s257 = scalar_select %p256, %s21, 1
      %p258 = scmp.lt.s32.totalorder %s254, 15
      %s259 = scalar_select %p258, %s254, 15
      %p260 = scmp.lt.s32.totalorder %s255, 1
      %s261 = scalar_select %p260, %s255, 1
      %s262 = smul.addr %s259, 2
      %s263 = sadd.s32 %s261, %s262
      %s264 = smul.addr %s257, 32
      %s265 = sadd.s32 %s263, %s264
      %s266 = smul.addr %s265, 4
      %s267 = scalar_lea.vmem %s1, %s266
      %p268 = pneg %p94
      %p269 = pneg %p91
      %p270 = scmp.lt.s32.totalorder %s22, 0
      %s271 = scalar_select %p270, %s22, 0
      %s272 = smul.addr %s271, 8
      %s273 = scalar_lea.vmem %s2, %s272
      %p274 = pneg %p120
      %p275 = pneg %p117
      %p276 = scmp.lt.s32.totalorder %s22, 0
      %s277 = scalar_select %p276, %s22, 0
      %s278 = smul.addr %s277, 8
      %s279 = scalar_lea.vmem %s3, %s278
      %p280 = pneg %p146
      %p281 = pneg %p143
      %p282 = pneg %p176
      %p283 = pneg %p173
      %s284 = smul.u32 2, %s23
      %p285 = scmp.lt.s32.totalorder %s21, 1
      %s286 = scalar_select %p285, %s21, 1
      %p287 = scmp.lt.s32.totalorder %s22, 0
      %s288 = scalar_select %p287, %s22, 0
      %p289 = scmp.lt.s32.totalorder %s284, 1
      %s290 = scalar_select %p289, %s284, 1
      %s291 = smul.addr %s288, 2
      %s292 = sadd.s32 %s290, %s291
      %s293 = smul.addr %s286, 2
      %s294 = sadd.s32 %s292, %s293
      %s295 = smul.addr %s294, 4
      %s296 = scalar_lea.vmem %s4, %s295
      %p297 = scmp.lt.s32.totalorder %s22, 0
      %s298 = scalar_select %p297, %s22, 0
      %p299 = scmp.lt.s32.totalorder %s24, 0
      %s300 = scalar_select %p299, %s24, 0
      %s301 = sadd.s32 %s300, %s298
      %s302 = smul.addr %s301, 4
      %s303 = scalar_lea.vmem %s0, %s302
      %s304 = smul.u32 16, %s24
      %s305 = smul.u32 2, %s23
      %p306 = scmp.lt.s32.totalorder %s21, 1
      %s307 = scalar_select %p306, %s21, 1
      %p308 = scmp.lt.s32.totalorder %s304, 15
      %s309 = scalar_select %p308, %s304, 15
      %p310 = scmp.lt.s32.totalorder %s305, 1
      %s311 = scalar_select %p310, %s305, 1
      %s312 = smul.addr %s309, 2
      %s313 = sadd.s32 %s311, %s312
      %s314 = smul.addr %s307, 32
      %s315 = sadd.s32 %s313, %s314
      %s316 = smul.addr %s315, 4
      %s317 = scalar_lea.vmem %s1, %s316
      %s318 = smul.u32 16, %s24
      %s319 = smul.u32 2, %s23
      %p320 = scmp.lt.s32.totalorder %s22, 0
      %s321 = scalar_select %p320, %s22, 0
      %s322 = smul.addr %s321, 8
      %s323 = scalar_lea.vmem %s2, %s322
      %p324 = scmp.lt.s32.totalorder %s22, 0
      %s325 = scalar_select %p324, %s22, 0
      %s326 = smul.addr %s325, 8
      %s327 = scalar_lea.vmem %s3, %s326
      %s328 = smul.u32 2, %s23
      %p329 = scmp.lt.s32.totalorder %s21, 1
      %s330 = scalar_select %p329, %s21, 1
      %p331 = scmp.lt.s32.totalorder %s22, 0
      %s332 = scalar_select %p331, %s22, 0
      %p333 = scmp.lt.s32.totalorder %s328, 1
      %s334 = scalar_select %p333, %s328, 1
      %s335 = smul.addr %s332, 2
      %s336 = sadd.s32 %s334, %s335
      %s337 = smul.addr %s330, 2
      %s338 = sadd.s32 %s336, %s337
      %s339 = smul.addr %s338, 4
      %s340 = scalar_lea.vmem %s4, %s339
      %s341 = smul.u32 2, %s23
      %p343 = scmp.eq.s32.totalorder %s24, 0
      // Predicated region
      $region37: #{bottleneck_iaff_forward.4} parent=35 // pred_check
        %p344 = pneg %p343
      $region38: #{bottleneck_iaff_forward.4} parent=35 // pred_check_branch
        %346 = sbr.rel (%p344) target = $region40
      $region39: #{bottleneck_iaff_forward.4} parent=35 // pred_region
        %347 = vst [vmem:[#allocation2] sm:$0xff] 0.0
        %348 = vst [vmem:[#allocation2 + $0x8] sm:$0xff] 0.0
      $region40: #{bottleneck_iaff_forward.4} parent=35 // pred_fallthru
        _
      %v349 = vld [vmem:[#allocation2] sm:$0xff]
      %v350 = vld [vmem:[#allocation2 + $0x8] sm:$0xff]
      %v351 = vld [vmem:[%s303] sm:$0xf]
      %v352 = vld [vmem:[%s317] sm:$0xff]
      %v353 = vld [vmem:[%s317 + $0x8] sm:$0xff]
      %v354 = vld [vmem:[%s317 + $0x10] sm:$0xff]
      %v355 = vld [vmem:[%s317 + $0x18] sm:$0xff]
      %v356 = vld [vmem:[%s317 + $0x20] sm:$0xff]
      %v357 = vld [vmem:[%s317 + $0x28] sm:$0xff]
      %v358 = vld [vmem:[%s317 + $0x30] sm:$0xff]
      %v359 = vld [vmem:[%s317 + $0x38] sm:$0xff]
      %v360 = vld [vmem:[%s317 + $0x40] sm:$0xff]
      %v361 = vld [vmem:[%s317 + $0x48] sm:$0xff]
      %v362 = vld [vmem:[%s317 + $0x50] sm:$0xff]
      %v363 = vld [vmem:[%s317 + $0x58] sm:$0xff]
      %v364 = vld [vmem:[%s317 + $0x60] sm:$0xff]
      %v365 = vld [vmem:[%s317 + $0x68] sm:$0xff]
      %v366 = vld [vmem:[%s317 + $0x70] sm:$0xff]
      %v367 = vld [vmem:[%s317 + $0x78] sm:$0xff]
      %v384 = vunpack.c.l.b16 %v352
      %v385 = vunpack.c.h.b16 %v352
      %v386 = vunpack.c.l.b16 %v353
      %v387 = vunpack.c.h.b16 %v353
      %v388 = vunpack.c.l.b16 %v354
      %v389 = vunpack.c.h.b16 %v354
      %v390 = vunpack.c.l.b16 %v355
      %v391 = vunpack.c.h.b16 %v355
      %v392 = vunpack.c.l.b16 %v356
      %v393 = vunpack.c.h.b16 %v356
      %v394 = vunpack.c.l.b16 %v357
      %v395 = vunpack.c.h.b16 %v357
      %v396 = vunpack.c.l.b16 %v358
      %v397 = vunpack.c.h.b16 %v358
      %v398 = vunpack.c.l.b16 %v359
      %v399 = vunpack.c.h.b16 %v359
      %v400 = vunpack.c.l.b16 %v360
      %v401 = vunpack.c.h.b16 %v360
      %v402 = vunpack.c.l.b16 %v361
      %v403 = vunpack.c.h.b16 %v361
      %v404 = vunpack.c.l.b16 %v362
      %v405 = vunpack.c.h.b16 %v362
      %v406 = vunpack.c.l.b16 %v363
      %v407 = vunpack.c.h.b16 %v363
      %v408 = vunpack.c.l.b16 %v364
      %v409 = vunpack.c.h.b16 %v364
      %v410 = vunpack.c.l.b16 %v365
      %v411 = vunpack.c.h.b16 %v365
      %v412 = vunpack.c.l.b16 %v366
      %v413 = vunpack.c.h.b16 %v366
      %v414 = vunpack.c.l.b16 %v367
      %v415 = vunpack.c.h.b16 %v367
      %v416 = vpack.c.b16 %v386, %v384
      %v417 = vpack.c.b16 %v387, %v385
      %v418 = vpack.c.b16 %v390, %v388
      %v419 = vpack.c.b16 %v391, %v389
      %v420 = vpack.c.b16 %v394, %v392
      %v421 = vpack.c.b16 %v395, %v393
      %v422 = vpack.c.b16 %v398, %v396
      %v423 = vpack.c.b16 %v399, %v397
      %v424 = vpack.c.b16 %v402, %v400
      %v425 = vpack.c.b16 %v403, %v401
      %v426 = vpack.c.b16 %v406, %v404
      %v427 = vpack.c.b16 %v407, %v405
      %v428 = vpack.c.b16 %v410, %v408
      %v429 = vpack.c.b16 %v411, %v409
      %v430 = vpack.c.b16 %v414, %v412
      %v431 = vpack.c.b16 %v415, %v413
      %448 = vmatprep.subr.bf16.mxu0 %v417
      %449 = vmatpush1.bf16.msra.mxu0 %v416
      %450 = vmatprep.subr.bf16.mxu0 %v419
      %451 = vmatpush1.bf16.msra.mxu0 %v418
      %452 = vmatprep.subr.bf16.mxu0 %v421
      %453 = vmatpush1.bf16.msra.mxu0 %v420
      %454 = vmatprep.subr.bf16.mxu0 %v423
      %455 = vmatpush1.bf16.msra.mxu0 %v422
      %456 = vmatprep.subr.bf16.mxu0 %v425
      %457 = vmatpush1.bf16.msra.mxu0 %v424
      %458 = vmatprep.subr.bf16.mxu0 %v427
      %459 = vmatpush1.bf16.msra.mxu0 %v426
      %460 = vmatprep.subr.bf16.mxu0 %v429
      %461 = vmatpush1.bf16.msra.mxu0 %v428
      %462 = vmatprep.subr.bf16.mxu0 %v431
      %463 = vmatpush1.bf16.msra.mxu0 %v430
      %464 = vmatprep.subr.bf16.mxu0 0
      %465 = vmatpush1.bf16.msra.mxu0 0
      %466 = vmatprep.subr.bf16.mxu0 0
      %467 = vmatpush1.bf16.msra.mxu0 0
      %468 = vmatprep.subr.bf16.mxu0 0
      %469 = vmatpush1.bf16.msra.mxu0 0
      %470 = vmatprep.subr.bf16.mxu0 0
      %471 = vmatpush1.bf16.msra.mxu0 0
      %472 = vmatprep.subr.bf16.mxu0 0
      %473 = vmatpush1.bf16.msra.mxu0 0
      %474 = vmatprep.subr.bf16.mxu0 0
      %475 = vmatpush1.bf16.msra.mxu0 0
      %476 = vmatprep.subr.bf16.mxu0 0
      %477 = vmatpush1.bf16.msra.mxu0 0
      %478 = vmatprep.subr.bf16.mxu0 0
      %479 = vmatpush1.bf16.msra.mxu0 0
      %480 = vmatprep.mubr.bf16.mxu0 0
      %481 = vmatmul.mubr.bf16.gmra.mrb[0].mxu0 %v351
      %v482 = vpop.f32.mrb[0].mxu0
      %v483 = vadd.f32 0.0, %v482
      %v484 = vpop.f32.mrb[0].mxu0
      %v485 = vadd.f32 0.0, %v484
      %v486 = vpop.f32.mrb[0].mxu0
      %v487 = vpop.f32.mrb[0].mxu0
      %488 = vdwg.mxu0
      %v489 = vadd.f32 %v349, %v483
      %v490 = vadd.f32 %v350, %v485
      %491 = vst [vmem:[#allocation2] sm:$0xff] %v489
      %492 = vst [vmem:[#allocation2 + $0x8] sm:$0xff] %v490
      // Predicated region
      $region41: #{bottleneck_iaff_forward.4} parent=35 // pred_check
        %p493 = pneg %p343
      $region42: #{bottleneck_iaff_forward.4} parent=35 // pred_check_branch
        %495 = sbr.rel (%p493) target = $region44
      $region43: #{bottleneck_iaff_forward.4} parent=35 // pred_region
        %v496 = vld [vmem:[#allocation2] sm:$0xff]
        %v497 = vld [vmem:[#allocation2 + $0x8] sm:$0xff]
        %v498 = vld [vmem:[%s323] sm:$0xff]
        %500 = vset.pattern.permute.xlu0 0
        %501 = vperm.xlu0 %500, %v498
        %v502 = vpop.permute.xlu0 %501
        %v504 = vmul.f32 %v496, %v502
        %v505 = vmul.f32 %v497, %v502
        %v506 = vld [vmem:[%s327] sm:$0xff]
        %508 = vset.pattern.permute.xlu0 0
        %509 = vperm.xlu0 %508, %v506
        %v510 = vpop.permute.xlu0 %509
        %v512 = vadd.f32 %v504, %v510
        %v513 = vadd.f32 %v505, %v510
        %v514 = vxor.u32 %v512, 2147483648
        %v515 = vxor.u32 %v513, 2147483648
        %v516 = vmul.f32 %v514, 1.442695
        %v517 = vpow.pop %v516
        %v518 = vmul.f32 %v515, 1.442695
        %v519 = vpow.pop %v518
        %v520 = vadd.f32 %v517, 1.0
        %v521 = vadd.f32 %v519, 1.0
        %v522 = vrcp.pop %v520
        %v523 = vmul.f32 1.0, %v522
        %v524 = vrcp.pop %v521
        %v525 = vmul.f32 1.0, %v524
        %v526 = vmul.f32 %v512, %v523
        %v527 = vmul.f32 %v513, %v525
        %v528 = vpack.c.bf16 %v526, %v526
        %v529 = vpack.c.bf16 %v527, %v527
        %v532 = vunpack.c.l.b16 %v528
        %v533 = vunpack.c.l.b16 %v529
        %v534 = vpack.c.b16 %v533, %v532
        %536 = vst [vmem:[%s340] sm:$0xff] %v534
      $region44: #{bottleneck_iaff_forward.4} parent=35 // pred_fallthru
        _
      %s537 = smul.u32 2, %s23
      %p538 = scmp.lt.s32.totalorder %s21, 1
      %s539 = scalar_select %p538, %s21, 1
      %p540 = scmp.lt.s32.totalorder %s22, 0
      %s541 = scalar_select %p540, %s22, 0
      %p542 = scmp.lt.s32.totalorder %s537, 1
      %s543 = scalar_select %p542, %s537, 1
      %s544 = smul.addr %s541, 2
      %s545 = sadd.s32 %s543, %s544
      %s546 = smul.addr %s539, 2
      %s547 = sadd.s32 %s545, %s546
      %s548 = smul.addr %s547, 4
      %s549 = scalar_lea.vmem %s4, %s548
      // Predicated region
      $region45: #{bottleneck_iaff_forward.4} parent=35 // pred_check
        %p550 = pneg %p173
      $region46: #{bottleneck_iaff_forward.4} parent=35 // pred_check_branch
        %552 = sbr.rel (%p550) target = $region48
      $region47: #{bottleneck_iaff_forward.4} parent=35 // pred_region
        %s553 = smul.u32 2, %s23
      $region48: #{bottleneck_iaff_forward.4} parent=35 // pred_fallthru
        _
    $region36: #{bottleneck_iaff_forward.4} parent=5 // pred_fallthru
      _
    %p554 = scmp.le.s32.totalorder 2, %s10
    // Predicated region
    $region49: #{bottleneck_iaff_forward.4} parent=5 // pred_check
      %p555 = pneg %p554
    $region50: #{bottleneck_iaff_forward.4} parent=5 // pred_check_branch
      %557 = sbr.rel (%p555) target = $region52
    $region51: #{bottleneck_iaff_forward.4} parent=5 // pred_region
      %s558 = ssub.s32 %s10, 2
      // Predicated region
      $region53: #{bottleneck_iaff_forward.4} parent=51 // pred_check
        %p559 = pneg %p179
      $region54: #{bottleneck_iaff_forward.4} parent=51 // pred_check_branch
        %561 = sbr.rel (%p559) target = $region56
      $region55: #{bottleneck_iaff_forward.4} parent=51 // pred_region
        %s562 = smul.u32 2, %s27
        %p563 = scmp.lt.s32.totalorder %s25, 1
        %s564 = scalar_select %p563, %s25, 1
        %p565 = scmp.lt.s32.totalorder %s26, 0
        %s566 = scalar_select %p565, %s26, 0
        %p567 = scmp.lt.s32.totalorder %s562, 1
        %s568 = scalar_select %p567, %s562, 1
        %s569 = smul.addr %s566, 2
        %s570 = sadd.s32 %s568, %s569
        %s571 = smul.addr %s564, 2
        %s572 = sadd.s32 %s570, %s571
        %s573 = smul.addr %s572, 4
        %s574 = scalar_lea.vmem %s4, %s573
      $region56: #{bottleneck_iaff_forward.4} parent=51 // pred_fallthru
        _
    $region52: #{bottleneck_iaff_forward.4} parent=5 // pred_fallthru
      _
  $region6: #{bottleneck_iaff_forward.4} parent=0 // loop_footer
    %s14 = sadd.s32 1, %s10
  $region7: #{bottleneck_iaff_forward.4} parent=0 // loop_footer_branch
    %9 = sbr.rel target = $region3
  $region8: #{bottleneck_iaff_forward.4} parent=0 // loop_exit
    _

// kernel: bottleneck_iaff_forward.6
$region0: #{bottleneck_iaff_forward.6}
  #allocation0 [shape = 'u32[]', space=smem, size = 0x4, offset = 0x4, fixed_abs, tag = 'smem constant byte address 0x4 - core index']
  #allocation1 [shape = 'u32[144,128]{1,0:T(1,128)}', space=vmem, size = 0x12000, scoped, tag = 'internal scratch']
  %s0 = inlined_call_operand.vmem [shape: bf16[2,4,256], index: 0, kind: input, shape index: {}]
  %s1 = inlined_call_operand.vmem [shape: bf16[2,4,256], index: 1, kind: input, shape index: {}]
  %s2 = inlined_call_operand.vmem [shape: f32[2,4,1], index: 2, kind: input, shape index: {}]
  %s3 = inlined_call_operand.vmem [shape: bf16[2,4], index: 3, kind: input, shape index: {}]
  %s4 = inlined_call_operand.vmem [shape: f32[2,1], index: 4, kind: input, shape index: {}]
  %s5 = inlined_call_operand.vmem [shape: bf16[4,2], index: 5, kind: input, shape index: {}]
  %s6 = inlined_call_operand.vmem [shape: f32[4,1], index: 6, kind: input, shape index: {}]
  %s7 = inlined_call_operand.vmem [shape: bf16[2,4,256], index: 7, kind: output, shape index: {0}]
  %s8 = inlined_call_operand.vmem [shape: f32[2,4,1], index: 8, kind: output, shape index: {1}]
  %9 = xla_tuple %s7, %s8
  %s10 = sld [smem:[#allocation0]]
  $region73: #{bottleneck_iaff_forward.6} parent=0
    _
  %s12 = ssub.s32 1, %s10
  %s13 = scalar_select 0, %s12, %s10
  loop: start=0, step=1, limit=4
  $region2: #{bottleneck_iaff_forward.6} parent=0 // loop_pre_header
    _
  $region3: #{bottleneck_iaff_forward.6} parent=0 // loop_header
    %s15 = sphi 0, %s19
    %p16 = scmp.ge.s32.totalorder %s15, 4
    %s22 = sphi 0, %s34
    %s23 = sphi 0, %s30
    %s24 = sphi 0, %s22
    %s25 = sphi 0, %s23
    %s26 = sphi 0, %s24
    %s27 = sphi 0, %s25
    %s39 = sphi 0, %s41
    %s42 = sphi 0, %s39
    %s43 = sphi 0, %s42
    %s59 = sphi 0, %s43
    %s67 = sphi 0, %s69
    %s70 = sphi 0, %s67
    %s71 = sphi 0, %s70
    %s87 = sphi 0, %s71
    %s93 = sphi 0, %s95
    %s96 = sphi 0, %s93
    %s97 = sphi 0, %s96
    %s113 = sphi 0, %s97
    %s117 = sphi 0, %s117
    %s119 = sphi 0, %s117
    %s120 = sphi 0, %s119
    %s134 = sphi 0, %s120
    %s138 = sphi 0, %s138
    %s140 = sphi 0, %s138
    %s141 = sphi 0, %s140
    %s155 = sphi 0, %s141
    %s159 = sphi 0, %s159
    %s161 = sphi 0, %s159
    %s162 = sphi 0, %s161
    %s176 = sphi 0, %s162
    %s180 = sphi 0, %s180
    %s182 = sphi 0, %s180
    %s183 = sphi 0, %s182
    %s197 = sphi 0, %s183
    %s205 = sphi 0, %s207
    %s208 = sphi 0, %s205
    %s209 = sphi 0, %s208
    %s225 = sphi 0, %s209
    %s231 = sphi 0, %s233
    %s234 = sphi 0, %s231
    %s235 = sphi 0, %s234
    %s251 = sphi 0, %s235
  $region4: #{bottleneck_iaff_forward.6} parent=0 // loop_header_branch
    %18 = sbr.rel (%p16) target = $region8
  $region5: #{bottleneck_iaff_forward.6} parent=0 // loop_body
    %s20 = ssub.s32 %s15, 1
    %s21 = ssub.s32 %s15, 2
    %s28 = sadd.s32 1, %s23
    %p29 = scmp.ge.s32.totalorder %s28, 1
    %s30 = scalar_select %p29, 0, %s28
    %s31 = sadd.s32 1, %s22
    %s32 = scalar_select %p29, %s31, %s22
    %p33 = scmp.ge.s32.totalorder %s32, 2
    %s34 = scalar_select %p33, 0, %s32
    %s35 = ssub.s32 %s22, %s34
    %s36 = ssub.s32 %s23, %s30
    %s37 = sor.u32 %s35, %s36
    %p38 = scmp.eq.s32.totalorder %s37, 0
    %s40 = sadd.s32 %s39, 1
    %s41 = scalar_select %p38, %s39, %s40
    %p44 = pneg %p38
    %p45 = scmp.eq.s32.totalorder %s15, 1
    %p46 = por %p44, %p45
    %p47 = scmp.ne.s32.totalorder %s39, %s42
    %p48 = scmp.eq.s32.totalorder %s15, 0
    %p49 = por %p47, %p48
    %p50 = scmp.ne.s32.totalorder %s39, %s42
    %p51 = scmp.eq.s32.totalorder %s20, 1
    %p52 = por %p50, %p51
    %p53 = scmp.ne.s32.totalorder %s42, %s43
    %p54 = scmp.eq.s32.totalorder %s20, 0
    %p55 = por %p53, %p54
    %p56 = scmp.ne.s32.totalorder %s42, %s43
    %p57 = scmp.eq.s32.totalorder %s21, 1
    %p58 = por %p56, %p57
    %p60 = scmp.ne.s32.totalorder %s43, %s59
    %p61 = scmp.eq.s32.totalorder %s21, 0
    %p62 = por %p60, %p61
    %s63 = ssub.s32 %s22, %s34
    %s64 = ssub.s32 %s23, %s30
    %s65 = sor.u32 %s63, %s64
    %p66 = scmp.eq.s32.totalorder %s65, 0
    %s68 = sadd.s32 %s67, 1
    %s69 = scalar_select %p66, %s67, %s68
    %p72 = pneg %p66
    %p73 = scmp.eq.s32.totalorder %s15, 1
    %p74 = por %p72, %p73
    %p75 = scmp.ne.s32.totalorder %s67, %s70
    %p76 = scmp.eq.s32.totalorder %s15, 0
    %p77 = por %p75, %p76
    %p78 = scmp.ne.s32.totalorder %s67, %s70
    %p79 = scmp.eq.s32.totalorder %s20, 1
    %p80 = por %p78, %p79
    %p81 = scmp.ne.s32.totalorder %s70, %s71
    %p82 = scmp.eq.s32.totalorder %s20, 0
    %p83 = por %p81, %p82
    %p84 = scmp.ne.s32.totalorder %s70, %s71
    %p85 = scmp.eq.s32.totalorder %s21, 1
    %p86 = por %p84, %p85
    %p88 = scmp.ne.s32.totalorder %s71, %s87
    %p89 = scmp.eq.s32.totalorder %s21, 0
    %p90 = por %p88, %p89
    %s91 = ssub.s32 %s22, %s34
    %p92 = scmp.eq.s32.totalorder %s91, 0
    %s94 = sadd.s32 %s93, 1
    %s95 = scalar_select %p92, %s93, %s94
    %p98 = pneg %p92
    %p99 = scmp.eq.s32.totalorder %s15, 1
    %p100 = por %p98, %p99
    %p101 = scmp.ne.s32.totalorder %s93, %s96
    %p102 = scmp.eq.s32.totalorder %s15, 0
    %p103 = por %p101, %p102
    %p104 = scmp.ne.s32.totalorder %s93, %s96
    %p105 = scmp.eq.s32.totalorder %s20, 1
    %p106 = por %p104, %p105
    %p107 = scmp.ne.s32.totalorder %s96, %s97
    %p108 = scmp.eq.s32.totalorder %s20, 0
    %p109 = por %p107, %p108
    %p110 = scmp.ne.s32.totalorder %s96, %s97
    %p111 = scmp.eq.s32.totalorder %s21, 1
    %p112 = por %p110, %p111
    %p114 = scmp.ne.s32.totalorder %s97, %s113
    %p115 = scmp.eq.s32.totalorder %s21, 0
    %p116 = por %p114, %p115
    %s118 = sadd.s32 %s117, 1
    %p121 = scmp.eq.s32.totalorder %s15, 1
    %p122 = scmp.ne.s32.totalorder %s117, %s119
    %p123 = scmp.eq.s32.totalorder %s15, 0
    %p124 = por %p122, %p123
    %p125 = scmp.ne.s32.totalorder %s117, %s119
    %p126 = scmp.eq.s32.totalorder %s20, 1
    %p127 = por %p125, %p126
    %p128 = scmp.ne.s32.totalorder %s119, %s120
    %p129 = scmp.eq.s32.totalorder %s20, 0
    %p130 = por %p128, %p129
    %p131 = scmp.ne.s32.totalorder %s119, %s120
    %p132 = scmp.eq.s32.totalorder %s21, 1
    %p133 = por %p131, %p132
    %p135 = scmp.ne.s32.totalorder %s120, %s134
    %p136 = scmp.eq.s32.totalorder %s21, 0
    %p137 = por %p135, %p136
    %s139 = sadd.s32 %s138, 1
    %p142 = scmp.eq.s32.totalorder %s15, 1
    %p143 = scmp.ne.s32.totalorder %s138, %s140
    %p144 = scmp.eq.s32.totalorder %s15, 0
    %p145 = por %p143, %p144
    %p146 = scmp.ne.s32.totalorder %s138, %s140
    %p147 = scmp.eq.s32.totalorder %s20, 1
    %p148 = por %p146, %p147
    %p149 = scmp.ne.s32.totalorder %s140, %s141
    %p150 = scmp.eq.s32.totalorder %s20, 0
    %p151 = por %p149, %p150
    %p152 = scmp.ne.s32.totalorder %s140, %s141
    %p153 = scmp.eq.s32.totalorder %s21, 1
    %p154 = por %p152, %p153
    %p156 = scmp.ne.s32.totalorder %s141, %s155
    %p157 = scmp.eq.s32.totalorder %s21, 0
    %p158 = por %p156, %p157
    %s160 = sadd.s32 %s159, 1
    %p163 = scmp.eq.s32.totalorder %s15, 1
    %p164 = scmp.ne.s32.totalorder %s159, %s161
    %p165 = scmp.eq.s32.totalorder %s15, 0
    %p166 = por %p164, %p165
    %p167 = scmp.ne.s32.totalorder %s159, %s161
    %p168 = scmp.eq.s32.totalorder %s20, 1
    %p169 = por %p167, %p168
    %p170 = scmp.ne.s32.totalorder %s161, %s162
    %p171 = scmp.eq.s32.totalorder %s20, 0
    %p172 = por %p170, %p171
    %p173 = scmp.ne.s32.totalorder %s161, %s162
    %p174 = scmp.eq.s32.totalorder %s21, 1
    %p175 = por %p173, %p174
    %p177 = scmp.ne.s32.totalorder %s162, %s176
    %p178 = scmp.eq.s32.totalorder %s21, 0
    %p179 = por %p177, %p178
    %s181 = sadd.s32 %s180, 1
    %p184 = scmp.eq.s32.totalorder %s15, 1
    %p185 = scmp.ne.s32.totalorder %s180, %s182
    %p186 = scmp.eq.s32.totalorder %s15, 0
    %p187 = por %p185, %p186
    %p188 = scmp.ne.s32.totalorder %s180, %s182
    %p189 = scmp.eq.s32.totalorder %s20, 1
    %p190 = por %p188, %p189
    %p191 = scmp.ne.s32.totalorder %s182, %s183
    %p192 = scmp.eq.s32.totalorder %s20, 0
    %p193 = por %p191, %p192
    %p194 = scmp.ne.s32.totalorder %s182, %s183
    %p195 = scmp.eq.s32.totalorder %s21, 1
    %p196 = por %p194, %p195
    %p198 = scmp.ne.s32.totalorder %s183, %s197
    %p199 = scmp.eq.s32.totalorder %s21, 0
    %p200 = por %p198, %p199
    %s201 = ssub.s32 %s22, %s34
    %s202 = ssub.s32 %s23, %s30
    %s203 = sor.u32 %s201, %s202
    %p204 = scmp.eq.s32.totalorder %s203, 0
    %s206 = sadd.s32 %s205, 1
    %s207 = scalar_select %p204, %s205, %s206
    %p210 = pneg %p204
    %p211 = scmp.eq.s32.totalorder %s15, 1
    %p212 = por %p210, %p211
    %p213 = scmp.ne.s32.totalorder %s205, %s208
    %p214 = scmp.eq.s32.totalorder %s15, 0
    %p215 = por %p213, %p214
    %p216 = scmp.ne.s32.totalorder %s205, %s208
    %p217 = scmp.eq.s32.totalorder %s20, 1
    %p218 = por %p216, %p217
    %p219 = scmp.ne.s32.totalorder %s208, %s209
    %p220 = scmp.eq.s32.totalorder %s20, 0
    %p221 = por %p219, %p220
    %p222 = scmp.ne.s32.totalorder %s208, %s209
    %p223 = scmp.eq.s32.totalorder %s21, 1
    %p224 = por %p222, %p223
    %p226 = scmp.ne.s32.totalorder %s209, %s225
    %p227 = scmp.eq.s32.totalorder %s21, 0
    %p228 = por %p226, %p227
    %s229 = ssub.s32 %s22, %s34
    %p230 = scmp.eq.s32.totalorder %s229, 0
    %s232 = sadd.s32 %s231, 1
    %s233 = scalar_select %p230, %s231, %s232
    %p236 = pneg %p230
    %p237 = scmp.eq.s32.totalorder %s15, 1
    %p238 = por %p236, %p237
    %p239 = scmp.ne.s32.totalorder %s231, %s234
    %p240 = scmp.eq.s32.totalorder %s15, 0
    %p241 = por %p239, %p240
    %p242 = scmp.ne.s32.totalorder %s231, %s234
    %p243 = scmp.eq.s32.totalorder %s20, 1
    %p244 = por %p242, %p243
    %p245 = scmp.ne.s32.totalorder %s234, %s235
    %p246 = scmp.eq.s32.totalorder %s20, 0
    %p247 = por %p245, %p246
    %p248 = scmp.ne.s32.totalorder %s234, %s235
    %p249 = scmp.eq.s32.totalorder %s21, 1
    %p250 = por %p248, %p249
    %p252 = scmp.ne.s32.totalorder %s235, %s251
    %p253 = scmp.eq.s32.totalorder %s21, 0
    %p254 = por %p252, %p253
    %p255 = scmp.le.s32.totalorder 1, %s15
    %p256 = scmp.lt.s32.totalorder %s15, 3
    %p257 = pnand %p255, %p256
    %p258 = pneg %p257
    // Predicated region
    $region9: #{bottleneck_iaff_forward.6} parent=5 // pred_check
      _
    $region10: #{bottleneck_iaff_forward.6} parent=5 // pred_check_branch
      %260 = sbr.rel (%p257) target = $region12
    $region11: #{bottleneck_iaff_forward.6} parent=5 // pred_region
      %s261 = ssub.s32 %s15, 1
      // Predicated region
      $region13: #{bottleneck_iaff_forward.6} parent=11 // pred_check
        %p262 = pneg %p130
      $region14: #{bottleneck_iaff_forward.6} parent=11 // pred_check_branch
        %264 = sbr.rel (%p262) target = $region16
      $region15: #{bottleneck_iaff_forward.6} parent=11 // pred_region
        _
      $region16: #{bottleneck_iaff_forward.6} parent=11 // pred_fallthru
        _
      // Predicated region
      $region17: #{bottleneck_iaff_forward.6} parent=11 // pred_check
        %p265 = pneg %p151
      $region18: #{bottleneck_iaff_forward.6} parent=11 // pred_check_branch
        %267 = sbr.rel (%p265) target = $region20
      $region19: #{bottleneck_iaff_forward.6} parent=11 // pred_region
        _
      $region20: #{bottleneck_iaff_forward.6} parent=11 // pred_fallthru
        _
      // Predicated region
      $region21: #{bottleneck_iaff_forward.6} parent=11 // pred_check
        %p268 = pneg %p172
      $region22: #{bottleneck_iaff_forward.6} parent=11 // pred_check_branch
        %270 = sbr.rel (%p268) target = $region24
      $region23: #{bottleneck_iaff_forward.6} parent=11 // pred_region
        _
      $region24: #{bottleneck_iaff_forward.6} parent=11 // pred_fallthru
        _
      // Predicated region
      $region25: #{bottleneck_iaff_forward.6} parent=11 // pred_check
        %p271 = pneg %p193
      $region26: #{bottleneck_iaff_forward.6} parent=11 // pred_check_branch
        %273 = sbr.rel (%p271) target = $region28
      $region27: #{bottleneck_iaff_forward.6} parent=11 // pred_region
        _
      $region28: #{bottleneck_iaff_forward.6} parent=11 // pred_fallthru
        _
    $region12: #{bottleneck_iaff_forward.6} parent=5 // pred_fallthru
      _
    %p274 = scmp.lt.s32.totalorder %s15, 2
    // Predicated region
    $region29: #{bottleneck_iaff_forward.6} parent=5 // pred_check
      %p275 = pneg %p274
    $region30: #{bottleneck_iaff_forward.6} parent=5 // pred_check_branch
      %277 = sbr.rel (%p275) target = $region32
    $region31: #{bottleneck_iaff_forward.6} parent=5 // pred_region
      // Predicated region
      $region33: #{bottleneck_iaff_forward.6} parent=31 // pred_check
        %p278 = pneg %p49
      $region34: #{bottleneck_iaff_forward.6} parent=31 // pred_check_branch
        %280 = sbr.rel (%p278) target = $region36
      $region35: #{bottleneck_iaff_forward.6} parent=31 // pred_region
        %s281 = smul.u32 2, %s23
        %p282 = scmp.lt.s32.totalorder %s22, 1
        %s283 = scalar_select %p282, %s22, 1
        %p284 = scmp.lt.s32.totalorder %s281, 1
        %s285 = scalar_select %p284, %s281, 1
        %s286 = smul.addr %s283, 2
        %s287 = sadd.s32 %s285, %s286
        %s288 = smul.addr %s287, 2
        %s289 = scalar_lea.vmem %s0, %s288
        %s290 = smul.u32 2, %s23
      $region36: #{bottleneck_iaff_forward.6} parent=31 // pred_fallthru
        _
      // Predicated region
      $region37: #{bottleneck_iaff_forward.6} parent=31 // pred_check
        %p291 = pneg %p77
      $region38: #{bottleneck_iaff_forward.6} parent=31 // pred_check_branch
        %293 = sbr.rel (%p291) target = $region40
      $region39: #{bottleneck_iaff_forward.6} parent=31 // pred_region
        %s294 = smul.u32 2, %s23
        %p295 = scmp.lt.s32.totalorder %s22, 1
        %s296 = scalar_select %p295, %s22, 1
        %p297 = scmp.lt.s32.totalorder %s294, 1
        %s298 = scalar_select %p297, %s294, 1
        %s299 = smul.addr %s296, 2
        %s300 = sadd.s32 %s298, %s299
        %s301 = smul.addr %s300, 2
        %s302 = scalar_lea.vmem %s1, %s301
        %s303 = smul.u32 2, %s23
      $region40: #{bottleneck_iaff_forward.6} parent=31 // pred_fallthru
        _
      // Predicated region
      $region41: #{bottleneck_iaff_forward.6} parent=31 // pred_check
        %p304 = pneg %p103
      $region42: #{bottleneck_iaff_forward.6} parent=31 // pred_check_branch
        %306 = sbr.rel (%p304) target = $region44
      $region43: #{bottleneck_iaff_forward.6} parent=31 // pred_region
        %p307 = scmp.lt.s32.totalorder %s22, 1
        %s308 = scalar_select %p307, %s22, 1
        %s309 = smul.addr %s308, 4
        %s310 = scalar_lea.vmem %s2, %s309
      $region44: #{bottleneck_iaff_forward.6} parent=31 // pred_fallthru
        _
    $region32: #{bottleneck_iaff_forward.6} parent=5 // pred_fallthru
      _
    %p311 = scmp.le.s32.totalorder 1, %s15
    %p312 = scmp.lt.s32.totalorder %s15, 3
    %p313 = pnand %p311, %p312
    %p314 = pneg %p313
    // Predicated region
    $region45: #{bottleneck_iaff_forward.6} parent=5 // pred_check
      _
    $region46: #{bottleneck_iaff_forward.6} parent=5 // pred_check_branch
      %316 = sbr.rel (%p313) target = $region48
    $region47: #{bottleneck_iaff_forward.6} parent=5 // pred_region
      %s317 = ssub.s32 %s15, 1
      %s318 = smul.u32 2, %s25
      %p319 = scmp.lt.s32.totalorder %s24, 1
      %s320 = scalar_select %p319, %s24, 1
      %p321 = scmp.lt.s32.totalorder %s318, 1
      %s322 = scalar_select %p321, %s318, 1
      %s323 = smul.addr %s320, 2
      %s324 = sadd.s32 %s322, %s323
      %s325 = smul.addr %s324, 2
      %s326 = scalar_lea.vmem %s0, %s325
      %p327 = pneg %p55
      %p328 = pneg %p52
      %s329 = smul.u32 2, %s25
      %p330 = scmp.lt.s32.totalorder %s24, 1
      %s331 = scalar_select %p330, %s24, 1
      %p332 = scmp.lt.s32.totalorder %s329, 1
      %s333 = scalar_select %p332, %s329, 1
      %s334 = smul.addr %s331, 2
      %s335 = sadd.s32 %s333, %s334
      %s336 = smul.addr %s335, 2
      %s337 = scalar_lea.vmem %s1, %s336
      %p338 = pneg %p83
      %p339 = pneg %p80
      %p340 = scmp.lt.s32.totalorder %s24, 1
      %s341 = scalar_select %p340, %s24, 1
      %s342 = smul.addr %s341, 4
      %s343 = scalar_lea.vmem %s2, %s342
      %p344 = pneg %p109
      %p345 = pneg %p106
      %p346 = pneg %p130
      %p347 = pneg %p127
      %p348 = pneg %p151
      %p349 = pneg %p148
      %p350 = pneg %p172
      %p351 = pneg %p169
      %p352 = pneg %p193
      %p353 = pneg %p190
      %p354 = pneg %p221
      %p355 = pneg %p218
      %s356 = smul.u32 2, %s25
      %p357 = scmp.lt.s32.totalorder %s24, 1
      %s358 = scalar_select %p357, %s24, 1
      %p359 = scmp.lt.s32.totalorder %s356, 1
      %s360 = scalar_select %p359, %s356, 1
      %s361 = smul.addr %s358, 2
      %s362 = sadd.s32 %s360, %s361
      %s363 = smul.addr %s362, 2
      %s364 = scalar_lea.vmem %s7, %s363
      %p365 = pneg %p247
      %p366 = pneg %p244
      %p367 = scmp.lt.s32.totalorder %s24, 1
      %s368 = scalar_select %p367, %s24, 1
      %s369 = smul.addr %s368, 4
      %s370 = scalar_lea.vmem %s8, %s369
      %s371 = smul.u32 2, %s25
      %p372 = scmp.lt.s32.totalorder %s24, 1
      %s373 = scalar_select %p372, %s24, 1
      %p374 = scmp.lt.s32.totalorder %s371, 1
      %s375 = scalar_select %p374, %s371, 1
      %s376 = smul.addr %s373, 2
      %s377 = sadd.s32 %s375, %s376
      %s378 = smul.addr %s377, 2
      %s379 = scalar_lea.vmem %s0, %s378
      %s380 = smul.u32 2, %s25
      %s381 = smul.u32 2, %s25
      %p382 = scmp.lt.s32.totalorder %s24, 1
      %s383 = scalar_select %p382, %s24, 1
      %p384 = scmp.lt.s32.totalorder %s381, 1
      %s385 = scalar_select %p384, %s381, 1
      %s386 = smul.addr %s383, 2
      %s387 = sadd.s32 %s385, %s386
      %s388 = smul.addr %s387, 2
      %s389 = scalar_lea.vmem %s1, %s388
      %s390 = smul.u32 2, %s25
      %p391 = scmp.lt.s32.totalorder %s24, 1
      %s392 = scalar_select %p391, %s24, 1
      %s393 = smul.addr %s392, 4
      %s394 = scalar_lea.vmem %s2, %s393
      %s395 = smul.u32 2, %s25
      %p396 = scmp.lt.s32.totalorder %s24, 1
      %s397 = scalar_select %p396, %s24, 1
      %p398 = scmp.lt.s32.totalorder %s395, 1
      %s399 = scalar_select %p398, %s395, 1
      %s400 = smul.addr %s397, 2
      %s401 = sadd.s32 %s399, %s400
      %s402 = smul.addr %s401, 2
      %s403 = scalar_lea.vmem %s7, %s402
      %s404 = smul.u32 2, %s25
      %p405 = scmp.lt.s32.totalorder %s24, 1
      %s406 = scalar_select %p405, %s24, 1
      %s407 = smul.addr %s406, 4
      %s408 = scalar_lea.vmem %s8, %s407
      %v410 = vld [vmem:[%s379] sm:$0xf]
      %v411 = vunpack.c.l.bf16 %v410
      %v412 = vld [vmem:[%s389] sm:$0xf]
      %v413 = vunpack.c.l.bf16 %v412
      %v414 = vadd.f32 %v411, %v413
      %v416 = vcombine.high %v414, %v414
      %v418 = vpack.c.bf16 %v414, %v414
      %v419 = vpack.c.bf16 %v416, %v416
      %v420 = vld [vmem:[%s3] sm:$0x1]
      %v421 = vld [vmem:[%s4] sm:$0x3]
      %423 = vset.pattern.permute.xlu0 0
      %424 = vperm.xlu0 %423, %v421
      %v425 = vpop.permute.xlu0 %424
      %vm427 = vcmask 31744
      %v429 = vsel %vm427, %v420, 0
      %vm431 = vcmask 1041408
      %v433 = vsel %vm431, %v418, 0
      %v436 = vsel %vm431, %v419, 0
      %438 = vmatprep.subr.bf16.mxu0 %v436
      %439 = vmatpush1.bf16.msra.mxu0 %v433
      %440 = vmatprep.subr.bf16.mxu0 0
      %441 = vmatpush1.bf16.msra.mxu0 0
      %442 = vmatprep.subr.bf16.mxu0 0
      %443 = vmatpush1.bf16.msra.mxu0 0
      %444 = vmatprep.subr.bf16.mxu0 0
      %445 = vmatpush1.bf16.msra.mxu0 0
      %446 = vmatprep.subr.bf16.mxu0 0
      %447 = vmatpush1.bf16.msra.mxu0 0
      %448 = vmatprep.subr.bf16.mxu0 0
      %449 = vmatpush1.bf16.msra.mxu0 0
      %450 = vmatprep.subr.bf16.mxu0 0
      %451 = vmatpush1.bf16.msra.mxu0 0
      %452 = vmatprep.subr.bf16.mxu0 0
      %453 = vmatpush1.bf16.msra.mxu0 0
      %454 = vmatprep.subr.bf16.mxu0 0
      %455 = vmatpush1.bf16.msra.mxu0 0
      %456 = vmatprep.subr.bf16.mxu0 0
      %457 = vmatpush1.bf16.msra.mxu0 0
      %458 = vmatprep.subr.bf16.mxu0 0
      %459 = vmatpush1.bf16.msra.mxu0 0
      %460 = vmatprep.subr.bf16.mxu0 0
      %461 = vmatpush1.bf16.msra.mxu0 0
      %462 = vmatprep.subr.bf16.mxu0 0
      %463 = vmatpush1.bf16.msra.mxu0 0
      %464 = vmatprep.subr.bf16.mxu0 0
      %465 = vmatpush1.bf16.msra.mxu0 0
      %466 = vmatprep.subr.bf16.mxu0 0
      %467 = vmatpush1.bf16.msra.mxu0 0
      %468 = vmatprep.subr.bf16.mxu0 0
      %469 = vmatpush1.bf16.msra.mxu0 0
      %470 = vmatprep.mubr.bf16.mxu0 0
      %471 = vmatmul.mubr.bf16.gmra.mrb[0].mxu0 %v429
      %v472 = vpop.f32.mrb[0].mxu0
      %v473 = vadd.f32 %v425, %v472
      %v474 = vpop.f32.mrb[0].mxu0
      %v475 = vadd.f32 %v425, %v474
      %v476 = vpop.f32.mrb[0].mxu0
      %v477 = vpop.f32.mrb[0].mxu0
      %478 = vdwg.mxu0
      %v479 = vmax.f32 %v473, 0.0
      %v480 = vmax.f32 %v475, 0.0
      %v481 = vpack.c.bf16 %v479, %v479
      %v482 = vpack.c.bf16 %v480, %v480
      %v483 = vld [vmem:[%s5] sm:$0x3]
      %v484 = vld [vmem:[%s6] sm:$0xf]
      %486 = vset.pattern.permute.xlu0 0
      %487 = vperm.xlu0 %486, %v484
      %v488 = vpop.permute.xlu0 %487
      %vm490 = vcmask 15360
      %v492 = vsel %vm490, %v483, 0
      %vm494 = vcmask 1040384
      %v496 = vsel %vm494, %v481, 0
      %v499 = vsel %vm494, %v482, 0
      %501 = vmatprep.subr.bf16.mxu0 %v499
      %502 = vmatpush1.bf16.msra.mxu0 %v496
      %503 = vmatprep.subr.bf16.mxu0 0
      %504 = vmatpush1.bf16.msra.mxu0 0
      %505 = vmatprep.subr.bf16.mxu0 0
      %506 = vmatpush1.bf16.msra.mxu0 0
      %507 = vmatprep.subr.bf16.mxu0 0
      %508 = vmatpush1.bf16.msra.mxu0 0
      %509 = vmatprep.subr.bf16.mxu0 0
      %510 = vmatpush1.bf16.msra.mxu0 0
      %511 = vmatprep.subr.bf16.mxu0 0
      %512 = vmatpush1.bf16.msra.mxu0 0
      %513 = vmatprep.subr.bf16.mxu0 0
      %514 = vmatpush1.bf16.msra.mxu0 0
      %515 = vmatprep.subr.bf16.mxu0 0
      %516 = vmatpush1.bf16.msra.mxu0 0
      %517 = vmatprep.subr.bf16.mxu0 0
      %518 = vmatpush1.bf16.msra.mxu0 0
      %519 = vmatprep.subr.bf16.mxu0 0
      %520 = vmatpush1.bf16.msra.mxu0 0
      %521 = vmatprep.subr.bf16.mxu0 0
      %522 = vmatpush1.bf16.msra.mxu0 0
      %523 = vmatprep.subr.bf16.mxu0 0
      %524 = vmatpush1.bf16.msra.mxu0 0
      %525 = vmatprep.subr.bf16.mxu0 0
      %526 = vmatpush1.bf16.msra.mxu0 0
      %527 = vmatprep.subr.bf16.mxu0 0
      %528 = vmatpush1.bf16.msra.mxu0 0
      %529 = vmatprep.subr.bf16.mxu0 0
      %530 = vmatpush1.bf16.msra.mxu0 0
      %531 = vmatprep.subr.bf16.mxu0 0
      %532 = vmatpush1.bf16.msra.mxu0 0
      %533 = vmatprep.mubr.bf16.mxu0 0
      %534 = vmatmul.mubr.bf16.gmra.mrb[0].mxu0 %v492
      %v535 = vpop.f32.mrb[0].mxu0
      %v536 = vadd.f32 %v488, %v535
      %v537 = vpop.f32.mrb[0].mxu0
      %v538 = vadd.f32 %v488, %v537
      %v539 = vpop.f32.mrb[0].mxu0
      %v540 = vpop.f32.mrb[0].mxu0
      %541 = vdwg.mxu0
      %v542 = vld [vmem:[%s394] sm:$0xf]
      %544 = vset.pattern.permute.xlu0 0
      %545 = vperm.xlu0 %544, %v542
      %v546 = vpop.permute.xlu0 %545
      %v548 = vadd.f32 %v536, %v546
      %v549 = vadd.f32 %v538, %v546
      %v550 = vxor.u32 %v548, 2147483648
      %v551 = vxor.u32 %v549, 2147483648
      %v552 = vmul.f32 %v550, 1.442695
      %v553 = vpow.pop %v552
      %v554 = vmul.f32 %v551, 1.442695
      %v555 = vpow.pop %v554
      %v556 = vadd.f32 %v553, 1.0
      %v557 = vadd.f32 %v555, 1.0
      %v558 = vrcp.pop %v556
      %v559 = vmul.f32 1.0, %v558
      %v560 = vrcp.pop %v557
      %v561 = vmul.f32 1.0, %v560
      %v564 = vcombine.low %v559, %v561
      %v566 = vmul.f32 %v411, %v564
      %v567 = vsub.f32 1.0, %v559
      %v568 = vsub.f32 1.0, %v561
      %v571 = vcombine.low %v567, %v568
      %v573 = vmul.f32 %v413, %v571
      %v574 = vadd.f32 %v566, %v573
      %v576 = vcombine.high %v574, %v574
      %v578 = vpack.c.bf16 %v574, %v574
      %v579 = vpack.c.bf16 %v576, %v576
      %v582 = vcombine.low %v578, %v579
      %v584 = vunpack.c.l.s4 1983009808
      %v585 = vunpack.c.0.s8 %v584
      %v586 = vlaneseq
      %v587 = vshrl.u32 %v586, 7
      %v588 = vsub.s32 %v585, %v587
      %v589 = vrot.slane %v582, %v588
      %591 = vst [vmem:[%s403] sm:$0xf] %v589
      %p592 = scmp.eq.s32.totalorder %s25, 0
      // Predicated region
      $region49: #{bottleneck_iaff_forward.6} parent=47 // pred_check
        %p593 = pneg %p592
      $region50: #{bottleneck_iaff_forward.6} parent=47 // pred_check_branch
        %595 = sbr.rel (%p593) target = $region52
      $region51: #{bottleneck_iaff_forward.6} parent=47 // pred_region
        %vm596 = vcmask 3072
        %597 = vst.msk [vmem:[%s408] sm:$0xf] %vm596, 0.0
      $region52: #{bottleneck_iaff_forward.6} parent=47 // pred_fallthru
        _
      %v598 = vld [vmem:[%s408] sm:$0xf]
      %vm599 = vcmask 1043456
      %v600 = vsel %vm599, %v574, 0.0
      %v601 = vsel %vm599, %v576, 0.0
      %v602 = vadd.f32 %v600, %v601
      %603 = vadd.xlane.f32.xlu0 %v602
      %v604 = vpop.xlane.xlu0 %603
      %v605 = vadd.f32 %v598, %v604
      %vm606 = vcmask 3072
      %607 = vst.msk [vmem:[%s408] sm:$0xf] %vm606, %v605
      %s608 = smul.u32 2, %s25
      %p609 = scmp.lt.s32.totalorder %s24, 1
      %s610 = scalar_select %p609, %s24, 1
      %p611 = scmp.lt.s32.totalorder %s608, 1
      %s612 = scalar_select %p611, %s608, 1
      %s613 = smul.addr %s610, 2
      %s614 = sadd.s32 %s612, %s613
      %s615 = smul.addr %s614, 2
      %s616 = scalar_lea.vmem %s7, %s615
      %p617 = scmp.lt.s32.totalorder %s24, 1
      %s618 = scalar_select %p617, %s24, 1
      %s619 = smul.addr %s618, 4
      %s620 = scalar_lea.vmem %s8, %s619
      // Predicated region
      $region53: #{bottleneck_iaff_forward.6} parent=47 // pred_check
        %p621 = pneg %p218
      $region54: #{bottleneck_iaff_forward.6} parent=47 // pred_check_branch
        %623 = sbr.rel (%p621) target = $region56
      $region55: #{bottleneck_iaff_forward.6} parent=47 // pred_region
        %s624 = smul.u32 2, %s25
      $region56: #{bottleneck_iaff_forward.6} parent=47 // pred_fallthru
        _
      // Predicated region
      $region57: #{bottleneck_iaff_forward.6} parent=47 // pred_check
        %p625 = pneg %p244
      $region58: #{bottleneck_iaff_forward.6} parent=47 // pred_check_branch
        %627 = sbr.rel (%p625) target = $region60
      $region59: #{bottleneck_iaff_forward.6} parent=47 // pred_region
        _
      $region60: #{bottleneck_iaff_forward.6} parent=47 // pred_fallthru
        _
    $region48: #{bottleneck_iaff_forward.6} parent=5 // pred_fallthru
      _
    %p628 = scmp.le.s32.totalorder 2, %s15
    // Predicated region
    $region61: #{bottleneck_iaff_forward.6} parent=5 // pred_check
      %p629 = pneg %p628
    $region62: #{bottleneck_iaff_forward.6} parent=5 // pred_check_branch
      %631 = sbr.rel (%p629) target = $region64
    $region63: #{bottleneck_iaff_forward.6} parent=5 // pred_region
      %s632 = ssub.s32 %s15, 2
      // Predicated region
      $region65: #{bottleneck_iaff_forward.6} parent=63 // pred_check
        %p633 = pneg %p224
      $region66: #{bottleneck_iaff_forward.6} parent=63 // pred_check_branch
        %635 = sbr.rel (%p633) target = $region68
      $region67: #{bottleneck_iaff_forward.6} parent=63 // pred_region
        %s636 = smul.u32 2, %s27
        %p637 = scmp.lt.s32.totalorder %s26, 1
        %s638 = scalar_select %p637, %s26, 1
        %p639 = scmp.lt.s32.totalorder %s636, 1
        %s640 = scalar_select %p639, %s636, 1
        %s641 = smul.addr %s638, 2
        %s642 = sadd.s32 %s640, %s641
        %s643 = smul.addr %s642, 2
        %s644 = scalar_lea.vmem %s7, %s643
      $region68: #{bottleneck_iaff_forward.6} parent=63 // pred_fallthru
        _
      // Predicated region
      $region69: #{bottleneck_iaff_forward.6} parent=63 // pred_check
        %p645 = pneg %p250
      $region70: #{bottleneck_iaff_forward.6} parent=63 // pred_check_branch
        %647 = sbr.rel (%p645) target = $region72
      $region71: #{bottleneck_iaff_forward.6} parent=63 // pred_region
        %p648 = scmp.lt.s32.totalorder %s26, 1
        %s649 = scalar_select %p648, %s26, 1
        %s650 = smul.addr %s649, 4
        %s651 = scalar_lea.vmem %s8, %s650
      $region72: #{bottleneck_iaff_forward.6} parent=63 // pred_fallthru
        _
    $region64: #{bottleneck_iaff_forward.6} parent=5 // pred_fallthru
      _
  $region6: #{bottleneck_iaff_forward.6} parent=0 // loop_footer
    %s19 = sadd.s32 1, %s15
  $region7: #{bottleneck_iaff_forward.6} parent=0 // loop_footer_branch
    %14 = sbr.rel target = $region3
  $region8: #{bottleneck_iaff_forward.6} parent=0 // loop_exit
    _

// kernel: bottleneck_iaff_forward.7
$region0: #{bottleneck_iaff_forward.7}
  #allocation0 [shape = 'u32[]', space=smem, size = 0x4, offset = 0x4, fixed_abs, tag = 'smem constant byte address 0x4 - core index']
  #allocation1 [shape = 'u32[144,128]{1,0:T(1,128)}', space=vmem, size = 0x12000, scoped, tag = 'internal scratch']
  %s0 = inlined_call_operand.vmem [shape: bf16[2,4,256], index: 0, kind: input, shape index: {}]
  %s1 = inlined_call_operand.vmem [shape: bf16[2,4,256], index: 1, kind: input, shape index: {}]
  %s2 = inlined_call_operand.vmem [shape: bf16[2,4,256], index: 2, kind: input, shape index: {}]
  %s3 = inlined_call_operand.vmem [shape: f32[2,4,1], index: 3, kind: input, shape index: {}]
  %s4 = inlined_call_operand.vmem [shape: bf16[2,4], index: 4, kind: input, shape index: {}]
  %s5 = inlined_call_operand.vmem [shape: f32[2,1], index: 5, kind: input, shape index: {}]
  %s6 = inlined_call_operand.vmem [shape: bf16[4,2], index: 6, kind: input, shape index: {}]
  %s7 = inlined_call_operand.vmem [shape: f32[4,1], index: 7, kind: input, shape index: {}]
  %s8 = inlined_call_operand.vmem [shape: bf16[2,4,256], index: 8, kind: output, shape index: {}]
  %s9 = sld [smem:[#allocation0]]
  $region65: #{bottleneck_iaff_forward.7} parent=0
    _
  %s11 = ssub.s32 1, %s9
  %s12 = scalar_select 0, %s11, %s9
  loop: start=0, step=1, limit=4
  $region2: #{bottleneck_iaff_forward.7} parent=0 // loop_pre_header
    _
  $region3: #{bottleneck_iaff_forward.7} parent=0 // loop_header
    %s14 = sphi 0, %s18
    %p15 = scmp.ge.s32.totalorder %s14, 4
    %s21 = sphi 0, %s33
    %s22 = sphi 0, %s29
    %s23 = sphi 0, %s21
    %s24 = sphi 0, %s22
    %s25 = sphi 0, %s23
    %s26 = sphi 0, %s24
    %s38 = sphi 0, %s40
    %s41 = sphi 0, %s38
    %s42 = sphi 0, %s41
    %s58 = sphi 0, %s42
    %s66 = sphi 0, %s68
    %s69 = sphi 0, %s66
    %s70 = sphi 0, %s69
    %s86 = sphi 0, %s70
    %s94 = sphi 0, %s96
    %s97 = sphi 0, %s94
    %s98 = sphi 0, %s97
    %s114 = sphi 0, %s98
    %s120 = sphi 0, %s122
    %s123 = sphi 0, %s120
    %s124 = sphi 0, %s123
    %s140 = sphi 0, %s124
    %s144 = sphi 0, %s144
    %s146 = sphi 0, %s144
    %s147 = sphi 0, %s146
    %s161 = sphi 0, %s147
    %s165 = sphi 0, %s165
    %s167 = sphi 0, %s165
    %s168 = sphi 0, %s167
    %s182 = sphi 0, %s168
    %s186 = sphi 0, %s186
    %s188 = sphi 0, %s186
    %s189 = sphi 0, %s188
    %s203 = sphi 0, %s189
    %s207 = sphi 0, %s207
    %s209 = sphi 0, %s207
    %s210 = sphi 0, %s209
    %s224 = sphi 0, %s210
    %s232 = sphi 0, %s234
    %s235 = sphi 0, %s232
    %s236 = sphi 0, %s235
    %s252 = sphi 0, %s236
  $region4: #{bottleneck_iaff_forward.7} parent=0 // loop_header_branch
    %17 = sbr.rel (%p15) target = $region8
  $region5: #{bottleneck_iaff_forward.7} parent=0 // loop_body
    %s19 = ssub.s32 %s14, 1
    %s20 = ssub.s32 %s14, 2
    %s27 = sadd.s32 1, %s22
    %p28 = scmp.ge.s32.totalorder %s27, 1
    %s29 = scalar_select %p28, 0, %s27
    %s30 = sadd.s32 1, %s21
    %s31 = scalar_select %p28, %s30, %s21
    %p32 = scmp.ge.s32.totalorder %s31, 2
    %s33 = scalar_select %p32, 0, %s31
    %s34 = ssub.s32 %s21, %s33
    %s35 = ssub.s32 %s22, %s29
    %s36 = sor.u32 %s34, %s35
    %p37 = scmp.eq.s32.totalorder %s36, 0
    %s39 = sadd.s32 %s38, 1
    %s40 = scalar_select %p37, %s38, %s39
    %p43 = pneg %p37
    %p44 = scmp.eq.s32.totalorder %s14, 1
    %p45 = por %p43, %p44
    %p46 = scmp.ne.s32.totalorder %s38, %s41
    %p47 = scmp.eq.s32.totalorder %s14, 0
    %p48 = por %p46, %p47
    %p49 = scmp.ne.s32.totalorder %s38, %s41
    %p50 = scmp.eq.s32.totalorder %s19, 1
    %p51 = por %p49, %p50
    %p52 = scmp.ne.s32.totalorder %s41, %s42
    %p53 = scmp.eq.s32.totalorder %s19, 0
    %p54 = por %p52, %p53
    %p55 = scmp.ne.s32.totalorder %s41, %s42
    %p56 = scmp.eq.s32.totalorder %s20, 1
    %p57 = por %p55, %p56
    %p59 = scmp.ne.s32.totalorder %s42, %s58
    %p60 = scmp.eq.s32.totalorder %s20, 0
    %p61 = por %p59, %p60
    %s62 = ssub.s32 %s21, %s33
    %s63 = ssub.s32 %s22, %s29
    %s64 = sor.u32 %s62, %s63
    %p65 = scmp.eq.s32.totalorder %s64, 0
    %s67 = sadd.s32 %s66, 1
    %s68 = scalar_select %p65, %s66, %s67
    %p71 = pneg %p65
    %p72 = scmp.eq.s32.totalorder %s14, 1
    %p73 = por %p71, %p72
    %p74 = scmp.ne.s32.totalorder %s66, %s69
    %p75 = scmp.eq.s32.totalorder %s14, 0
    %p76 = por %p74, %p75
    %p77 = scmp.ne.s32.totalorder %s66, %s69
    %p78 = scmp.eq.s32.totalorder %s19, 1
    %p79 = por %p77, %p78
    %p80 = scmp.ne.s32.totalorder %s69, %s70
    %p81 = scmp.eq.s32.totalorder %s19, 0
    %p82 = por %p80, %p81
    %p83 = scmp.ne.s32.totalorder %s69, %s70
    %p84 = scmp.eq.s32.totalorder %s20, 1
    %p85 = por %p83, %p84
    %p87 = scmp.ne.s32.totalorder %s70, %s86
    %p88 = scmp.eq.s32.totalorder %s20, 0
    %p89 = por %p87, %p88
    %s90 = ssub.s32 %s21, %s33
    %s91 = ssub.s32 %s22, %s29
    %s92 = sor.u32 %s90, %s91
    %p93 = scmp.eq.s32.totalorder %s92, 0
    %s95 = sadd.s32 %s94, 1
    %s96 = scalar_select %p93, %s94, %s95
    %p99 = pneg %p93
    %p100 = scmp.eq.s32.totalorder %s14, 1
    %p101 = por %p99, %p100
    %p102 = scmp.ne.s32.totalorder %s94, %s97
    %p103 = scmp.eq.s32.totalorder %s14, 0
    %p104 = por %p102, %p103
    %p105 = scmp.ne.s32.totalorder %s94, %s97
    %p106 = scmp.eq.s32.totalorder %s19, 1
    %p107 = por %p105, %p106
    %p108 = scmp.ne.s32.totalorder %s97, %s98
    %p109 = scmp.eq.s32.totalorder %s19, 0
    %p110 = por %p108, %p109
    %p111 = scmp.ne.s32.totalorder %s97, %s98
    %p112 = scmp.eq.s32.totalorder %s20, 1
    %p113 = por %p111, %p112
    %p115 = scmp.ne.s32.totalorder %s98, %s114
    %p116 = scmp.eq.s32.totalorder %s20, 0
    %p117 = por %p115, %p116
    %s118 = ssub.s32 %s21, %s33
    %p119 = scmp.eq.s32.totalorder %s118, 0
    %s121 = sadd.s32 %s120, 1
    %s122 = scalar_select %p119, %s120, %s121
    %p125 = pneg %p119
    %p126 = scmp.eq.s32.totalorder %s14, 1
    %p127 = por %p125, %p126
    %p128 = scmp.ne.s32.totalorder %s120, %s123
    %p129 = scmp.eq.s32.totalorder %s14, 0
    %p130 = por %p128, %p129
    %p131 = scmp.ne.s32.totalorder %s120, %s123
    %p132 = scmp.eq.s32.totalorder %s19, 1
    %p133 = por %p131, %p132
    %p134 = scmp.ne.s32.totalorder %s123, %s124
    %p135 = scmp.eq.s32.totalorder %s19, 0
    %p136 = por %p134, %p135
    %p137 = scmp.ne.s32.totalorder %s123, %s124
    %p138 = scmp.eq.s32.totalorder %s20, 1
    %p139 = por %p137, %p138
    %p141 = scmp.ne.s32.totalorder %s124, %s140
    %p142 = scmp.eq.s32.totalorder %s20, 0
    %p143 = por %p141, %p142
    %s145 = sadd.s32 %s144, 1
    %p148 = scmp.eq.s32.totalorder %s14, 1
    %p149 = scmp.ne.s32.totalorder %s144, %s146
    %p150 = scmp.eq.s32.totalorder %s14, 0
    %p151 = por %p149, %p150
    %p152 = scmp.ne.s32.totalorder %s144, %s146
    %p153 = scmp.eq.s32.totalorder %s19, 1
    %p154 = por %p152, %p153
    %p155 = scmp.ne.s32.totalorder %s146, %s147
    %p156 = scmp.eq.s32.totalorder %s19, 0
    %p157 = por %p155, %p156
    %p158 = scmp.ne.s32.totalorder %s146, %s147
    %p159 = scmp.eq.s32.totalorder %s20, 1
    %p160 = por %p158, %p159
    %p162 = scmp.ne.s32.totalorder %s147, %s161
    %p163 = scmp.eq.s32.totalorder %s20, 0
    %p164 = por %p162, %p163
    %s166 = sadd.s32 %s165, 1
    %p169 = scmp.eq.s32.totalorder %s14, 1
    %p170 = scmp.ne.s32.totalorder %s165, %s167
    %p171 = scmp.eq.s32.totalorder %s14, 0
    %p172 = por %p170, %p171
    %p173 = scmp.ne.s32.totalorder %s165, %s167
    %p174 = scmp.eq.s32.totalorder %s19, 1
    %p175 = por %p173, %p174
    %p176 = scmp.ne.s32.totalorder %s167, %s168
    %p177 = scmp.eq.s32.totalorder %s19, 0
    %p178 = por %p176, %p177
    %p179 = scmp.ne.s32.totalorder %s167, %s168
    %p180 = scmp.eq.s32.totalorder %s20, 1
    %p181 = por %p179, %p180
    %p183 = scmp.ne.s32.totalorder %s168, %s182
    %p184 = scmp.eq.s32.totalorder %s20, 0
    %p185 = por %p183, %p184
    %s187 = sadd.s32 %s186, 1
    %p190 = scmp.eq.s32.totalorder %s14, 1
    %p191 = scmp.ne.s32.totalorder %s186, %s188
    %p192 = scmp.eq.s32.totalorder %s14, 0
    %p193 = por %p191, %p192
    %p194 = scmp.ne.s32.totalorder %s186, %s188
    %p195 = scmp.eq.s32.totalorder %s19, 1
    %p196 = por %p194, %p195
    %p197 = scmp.ne.s32.totalorder %s188, %s189
    %p198 = scmp.eq.s32.totalorder %s19, 0
    %p199 = por %p197, %p198
    %p200 = scmp.ne.s32.totalorder %s188, %s189
    %p201 = scmp.eq.s32.totalorder %s20, 1
    %p202 = por %p200, %p201
    %p204 = scmp.ne.s32.totalorder %s189, %s203
    %p205 = scmp.eq.s32.totalorder %s20, 0
    %p206 = por %p204, %p205
    %s208 = sadd.s32 %s207, 1
    %p211 = scmp.eq.s32.totalorder %s14, 1
    %p212 = scmp.ne.s32.totalorder %s207, %s209
    %p213 = scmp.eq.s32.totalorder %s14, 0
    %p214 = por %p212, %p213
    %p215 = scmp.ne.s32.totalorder %s207, %s209
    %p216 = scmp.eq.s32.totalorder %s19, 1
    %p217 = por %p215, %p216
    %p218 = scmp.ne.s32.totalorder %s209, %s210
    %p219 = scmp.eq.s32.totalorder %s19, 0
    %p220 = por %p218, %p219
    %p221 = scmp.ne.s32.totalorder %s209, %s210
    %p222 = scmp.eq.s32.totalorder %s20, 1
    %p223 = por %p221, %p222
    %p225 = scmp.ne.s32.totalorder %s210, %s224
    %p226 = scmp.eq.s32.totalorder %s20, 0
    %p227 = por %p225, %p226
    %s228 = ssub.s32 %s21, %s33
    %s229 = ssub.s32 %s22, %s29
    %s230 = sor.u32 %s228, %s229
    %p231 = scmp.eq.s32.totalorder %s230, 0
    %s233 = sadd.s32 %s232, 1
    %s234 = scalar_select %p231, %s232, %s233
    %p237 = pneg %p231
    %p238 = scmp.eq.s32.totalorder %s14, 1
    %p239 = por %p237, %p238
    %p240 = scmp.ne.s32.totalorder %s232, %s235
    %p241 = scmp.eq.s32.totalorder %s14, 0
    %p242 = por %p240, %p241
    %p243 = scmp.ne.s32.totalorder %s232, %s235
    %p244 = scmp.eq.s32.totalorder %s19, 1
    %p245 = por %p243, %p244
    %p246 = scmp.ne.s32.totalorder %s235, %s236
    %p247 = scmp.eq.s32.totalorder %s19, 0
    %p248 = por %p246, %p247
    %p249 = scmp.ne.s32.totalorder %s235, %s236
    %p250 = scmp.eq.s32.totalorder %s20, 1
    %p251 = por %p249, %p250
    %p253 = scmp.ne.s32.totalorder %s236, %s252
    %p254 = scmp.eq.s32.totalorder %s20, 0
    %p255 = por %p253, %p254
    %p256 = scmp.le.s32.totalorder 1, %s14
    %p257 = scmp.lt.s32.totalorder %s14, 3
    %p258 = pnand %p256, %p257
    %p259 = pneg %p258
    // Predicated region
    $region9: #{bottleneck_iaff_forward.7} parent=5 // pred_check
      _
    $region10: #{bottleneck_iaff_forward.7} parent=5 // pred_check_branch
      %261 = sbr.rel (%p258) target = $region12
    $region11: #{bottleneck_iaff_forward.7} parent=5 // pred_region
      %s262 = ssub.s32 %s14, 1
      // Predicated region
      $region13: #{bottleneck_iaff_forward.7} parent=11 // pred_check
        %p263 = pneg %p157
      $region14: #{bottleneck_iaff_forward.7} parent=11 // pred_check_branch
        %265 = sbr.rel (%p263) target = $region16
      $region15: #{bottleneck_iaff_forward.7} parent=11 // pred_region
        _
      $region16: #{bottleneck_iaff_forward.7} parent=11 // pred_fallthru
        _
      // Predicated region
      $region17: #{bottleneck_iaff_forward.7} parent=11 // pred_check
        %p266 = pneg %p178
      $region18: #{bottleneck_iaff_forward.7} parent=11 // pred_check_branch
        %268 = sbr.rel (%p266) target = $region20
      $region19: #{bottleneck_iaff_forward.7} parent=11 // pred_region
        _
      $region20: #{bottleneck_iaff_forward.7} parent=11 // pred_fallthru
        _
      // Predicated region
      $region21: #{bottleneck_iaff_forward.7} parent=11 // pred_check
        %p269 = pneg %p199
      $region22: #{bottleneck_iaff_forward.7} parent=11 // pred_check_branch
        %271 = sbr.rel (%p269) target = $region24
      $region23: #{bottleneck_iaff_forward.7} parent=11 // pred_region
        _
      $region24: #{bottleneck_iaff_forward.7} parent=11 // pred_fallthru
        _
      // Predicated region
      $region25: #{bottleneck_iaff_forward.7} parent=11 // pred_check
        %p272 = pneg %p220
      $region26: #{bottleneck_iaff_forward.7} parent=11 // pred_check_branch
        %274 = sbr.rel (%p272) target = $region28
      $region27: #{bottleneck_iaff_forward.7} parent=11 // pred_region
        _
      $region28: #{bottleneck_iaff_forward.7} parent=11 // pred_fallthru
        _
    $region12: #{bottleneck_iaff_forward.7} parent=5 // pred_fallthru
      _
    %p275 = scmp.lt.s32.totalorder %s14, 2
    // Predicated region
    $region29: #{bottleneck_iaff_forward.7} parent=5 // pred_check
      %p276 = pneg %p275
    $region30: #{bottleneck_iaff_forward.7} parent=5 // pred_check_branch
      %278 = sbr.rel (%p276) target = $region32
    $region31: #{bottleneck_iaff_forward.7} parent=5 // pred_region
      // Predicated region
      $region33: #{bottleneck_iaff_forward.7} parent=31 // pred_check
        %p279 = pneg %p48
      $region34: #{bottleneck_iaff_forward.7} parent=31 // pred_check_branch
        %281 = sbr.rel (%p279) target = $region36
      $region35: #{bottleneck_iaff_forward.7} parent=31 // pred_region
        %s282 = smul.u32 2, %s22
        %p283 = scmp.lt.s32.totalorder %s21, 1
        %s284 = scalar_select %p283, %s21, 1
        %p285 = scmp.lt.s32.totalorder %s282, 1
        %s286 = scalar_select %p285, %s282, 1
        %s287 = smul.addr %s284, 2
        %s288 = sadd.s32 %s286, %s287
        %s289 = smul.addr %s288, 2
        %s290 = scalar_lea.vmem %s0, %s289
        %s291 = smul.u32 2, %s22
      $region36: #{bottleneck_iaff_forward.7} parent=31 // pred_fallthru
        _
      // Predicated region
      $region37: #{bottleneck_iaff_forward.7} parent=31 // pred_check
        %p292 = pneg %p76
      $region38: #{bottleneck_iaff_forward.7} parent=31 // pred_check_branch
        %294 = sbr.rel (%p292) target = $region40
      $region39: #{bottleneck_iaff_forward.7} parent=31 // pred_region
        %s295 = smul.u32 2, %s22
        %p296 = scmp.lt.s32.totalorder %s21, 1
        %s297 = scalar_select %p296, %s21, 1
        %p298 = scmp.lt.s32.totalorder %s295, 1
        %s299 = scalar_select %p298, %s295, 1
        %s300 = smul.addr %s297, 2
        %s301 = sadd.s32 %s299, %s300
        %s302 = smul.addr %s301, 2
        %s303 = scalar_lea.vmem %s1, %s302
        %s304 = smul.u32 2, %s22
      $region40: #{bottleneck_iaff_forward.7} parent=31 // pred_fallthru
        _
      // Predicated region
      $region41: #{bottleneck_iaff_forward.7} parent=31 // pred_check
        %p305 = pneg %p104
      $region42: #{bottleneck_iaff_forward.7} parent=31 // pred_check_branch
        %307 = sbr.rel (%p305) target = $region44
      $region43: #{bottleneck_iaff_forward.7} parent=31 // pred_region
        %s308 = smul.u32 2, %s22
        %p309 = scmp.lt.s32.totalorder %s21, 1
        %s310 = scalar_select %p309, %s21, 1
        %p311 = scmp.lt.s32.totalorder %s308, 1
        %s312 = scalar_select %p311, %s308, 1
        %s313 = smul.addr %s310, 2
        %s314 = sadd.s32 %s312, %s313
        %s315 = smul.addr %s314, 2
        %s316 = scalar_lea.vmem %s2, %s315
        %s317 = smul.u32 2, %s22
      $region44: #{bottleneck_iaff_forward.7} parent=31 // pred_fallthru
        _
      // Predicated region
      $region45: #{bottleneck_iaff_forward.7} parent=31 // pred_check
        %p318 = pneg %p130
      $region46: #{bottleneck_iaff_forward.7} parent=31 // pred_check_branch
        %320 = sbr.rel (%p318) target = $region48
      $region47: #{bottleneck_iaff_forward.7} parent=31 // pred_region
        %p321 = scmp.lt.s32.totalorder %s21, 1
        %s322 = scalar_select %p321, %s21, 1
        %s323 = smul.addr %s322, 4
        %s324 = scalar_lea.vmem %s3, %s323
      $region48: #{bottleneck_iaff_forward.7} parent=31 // pred_fallthru
        _
    $region32: #{bottleneck_iaff_forward.7} parent=5 // pred_fallthru
      _
    %p325 = scmp.le.s32.totalorder 1, %s14
    %p326 = scmp.lt.s32.totalorder %s14, 3
    %p327 = pnand %p325, %p326
    %p328 = pneg %p327
    // Predicated region
    $region49: #{bottleneck_iaff_forward.7} parent=5 // pred_check
      _
    $region50: #{bottleneck_iaff_forward.7} parent=5 // pred_check_branch
      %330 = sbr.rel (%p327) target = $region52
    $region51: #{bottleneck_iaff_forward.7} parent=5 // pred_region
      %s331 = ssub.s32 %s14, 1
      %s332 = smul.u32 2, %s24
      %p333 = scmp.lt.s32.totalorder %s23, 1
      %s334 = scalar_select %p333, %s23, 1
      %p335 = scmp.lt.s32.totalorder %s332, 1
      %s336 = scalar_select %p335, %s332, 1
      %s337 = smul.addr %s334, 2
      %s338 = sadd.s32 %s336, %s337
      %s339 = smul.addr %s338, 2
      %s340 = scalar_lea.vmem %s0, %s339
      %p341 = pneg %p54
      %p342 = pneg %p51
      %s343 = smul.u32 2, %s24
      %p344 = scmp.lt.s32.totalorder %s23, 1
      %s345 = scalar_select %p344, %s23, 1
      %p346 = scmp.lt.s32.totalorder %s343, 1
      %s347 = scalar_select %p346, %s343, 1
      %s348 = smul.addr %s345, 2
      %s349 = sadd.s32 %s347, %s348
      %s350 = smul.addr %s349, 2
      %s351 = scalar_lea.vmem %s1, %s350
      %p352 = pneg %p82
      %p353 = pneg %p79
      %s354 = smul.u32 2, %s24
      %p355 = scmp.lt.s32.totalorder %s23, 1
      %s356 = scalar_select %p355, %s23, 1
      %p357 = scmp.lt.s32.totalorder %s354, 1
      %s358 = scalar_select %p357, %s354, 1
      %s359 = smul.addr %s356, 2
      %s360 = sadd.s32 %s358, %s359
      %s361 = smul.addr %s360, 2
      %s362 = scalar_lea.vmem %s2, %s361
      %p363 = pneg %p110
      %p364 = pneg %p107
      %p365 = scmp.lt.s32.totalorder %s23, 1
      %s366 = scalar_select %p365, %s23, 1
      %s367 = smul.addr %s366, 4
      %s368 = scalar_lea.vmem %s3, %s367
      %p369 = pneg %p136
      %p370 = pneg %p133
      %p371 = pneg %p157
      %p372 = pneg %p154
      %p373 = pneg %p178
      %p374 = pneg %p175
      %p375 = pneg %p199
      %p376 = pneg %p196
      %p377 = pneg %p220
      %p378 = pneg %p217
      %p379 = pneg %p248
      %p380 = pneg %p245
      %s381 = smul.u32 2, %s24
      %p382 = scmp.lt.s32.totalorder %s23, 1
      %s383 = scalar_select %p382, %s23, 1
      %p384 = scmp.lt.s32.totalorder %s381, 1
      %s385 = scalar_select %p384, %s381, 1
      %s386 = smul.addr %s383, 2
      %s387 = sadd.s32 %s385, %s386
      %s388 = smul.addr %s387, 2
      %s389 = scalar_lea.vmem %s8, %s388
      %s390 = smul.u32 2, %s24
      %p391 = scmp.lt.s32.totalorder %s23, 1
      %s392 = scalar_select %p391, %s23, 1
      %p393 = scmp.lt.s32.totalorder %s390, 1
      %s394 = scalar_select %p393, %s390, 1
      %s395 = smul.addr %s392, 2
      %s396 = sadd.s32 %s394, %s395
      %s397 = smul.addr %s396, 2
      %s398 = scalar_lea.vmem %s0, %s397
      %s399 = smul.u32 2, %s24
      %s400 = smul.u32 2, %s24
      %p401 = scmp.lt.s32.totalorder %s23, 1
      %s402 = scalar_select %p401, %s23, 1
      %p403 = scmp.lt.s32.totalorder %s400, 1
      %s404 = scalar_select %p403, %s400, 1
      %s405 = smul.addr %s402, 2
      %s406 = sadd.s32 %s404, %s405
      %s407 = smul.addr %s406, 2
      %s408 = scalar_lea.vmem %s1, %s407
      %s409 = smul.u32 2, %s24
      %s410 = smul.u32 2, %s24
      %p411 = scmp.lt.s32.totalorder %s23, 1
      %s412 = scalar_select %p411, %s23, 1
      %p413 = scmp.lt.s32.totalorder %s410, 1
      %s414 = scalar_select %p413, %s410, 1
      %s415 = smul.addr %s412, 2
      %s416 = sadd.s32 %s414, %s415
      %s417 = smul.addr %s416, 2
      %s418 = scalar_lea.vmem %s2, %s417
      %s419 = smul.u32 2, %s24
      %p420 = scmp.lt.s32.totalorder %s23, 1
      %s421 = scalar_select %p420, %s23, 1
      %s422 = smul.addr %s421, 4
      %s423 = scalar_lea.vmem %s3, %s422
      %s424 = smul.u32 2, %s24
      %p425 = scmp.lt.s32.totalorder %s23, 1
      %s426 = scalar_select %p425, %s23, 1
      %p427 = scmp.lt.s32.totalorder %s424, 1
      %s428 = scalar_select %p427, %s424, 1
      %s429 = smul.addr %s426, 2
      %s430 = sadd.s32 %s428, %s429
      %s431 = smul.addr %s430, 2
      %s432 = scalar_lea.vmem %s8, %s431
      %s433 = smul.u32 2, %s24
      %v435 = vld [vmem:[%s398] sm:$0xf]
      %v436 = vunpack.c.l.bf16 %v435
      %v437 = vld [vmem:[%s408] sm:$0xf]
      %v438 = vunpack.c.l.bf16 %v437
      %v439 = vld [vmem:[%s418] sm:$0xf]
      %v440 = vld [vmem:[%s4] sm:$0x1]
      %v441 = vld [vmem:[%s5] sm:$0x3]
      %443 = vset.pattern.permute.xlu0 0
      %444 = vperm.xlu0 %443, %v441
      %v445 = vpop.permute.xlu0 %444
      %v449 = vunpack.c.l.s4 1983009808
      %v450 = vunpack.c.0.s8 %v449
      %v451 = vlaneseq
      %v452 = vshrl.u32 %v451, 7
      %v453 = vsub.s32 %v450, %v452
      %v454 = vrot.slane %v439, %v453
      %v455 = vcombine.high %v454, %v454
      %vm456 = vcmask 31744
      %v458 = vsel %vm456, %v440, 0
      %vm460 = vcmask 1041408
      %v462 = vsel %vm460, %v454, 0
      %v465 = vsel %vm460, %v455, 0
      %467 = vmatprep.subr.bf16.mxu0 %v465
      %468 = vmatpush1.bf16.msra.mxu0 %v462
      %469 = vmatprep.subr.bf16.mxu0 0
      %470 = vmatpush1.bf16.msra.mxu0 0
      %471 = vmatprep.subr.bf16.mxu0 0
      %472 = vmatpush1.bf16.msra.mxu0 0
      %473 = vmatprep.subr.bf16.mxu0 0
      %474 = vmatpush1.bf16.msra.mxu0 0
      %475 = vmatprep.subr.bf16.mxu0 0
      %476 = vmatpush1.bf16.msra.mxu0 0
      %477 = vmatprep.subr.bf16.mxu0 0
      %478 = vmatpush1.bf16.msra.mxu0 0
      %479 = vmatprep.subr.bf16.mxu0 0
      %480 = vmatpush1.bf16.msra.mxu0 0
      %481 = vmatprep.subr.bf16.mxu0 0
      %482 = vmatpush1.bf16.msra.mxu0 0
      %483 = vmatprep.subr.bf16.mxu0 0
      %484 = vmatpush1.bf16.msra.mxu0 0
      %485 = vmatprep.subr.bf16.mxu0 0
      %486 = vmatpush1.bf16.msra.mxu0 0
      %487 = vmatprep.subr.bf16.mxu0 0
      %488 = vmatpush1.bf16.msra.mxu0 0
      %489 = vmatprep.subr.bf16.mxu0 0
      %490 = vmatpush1.bf16.msra.mxu0 0
      %491 = vmatprep.subr.bf16.mxu0 0
      %492 = vmatpush1.bf16.msra.mxu0 0
      %493 = vmatprep.subr.bf16.mxu0 0
      %494 = vmatpush1.bf16.msra.mxu0 0
      %495 = vmatprep.subr.bf16.mxu0 0
      %496 = vmatpush1.bf16.msra.mxu0 0
      %497 = vmatprep.subr.bf16.mxu0 0
      %498 = vmatpush1.bf16.msra.mxu0 0
      %499 = vmatprep.mubr.bf16.mxu0 0
      %500 = vmatmul.mubr.bf16.gmra.mrb[0].mxu0 %v458
      %v501 = vpop.f32.mrb[0].mxu0
      %v502 = vadd.f32 %v445, %v501
      %v503 = vpop.f32.mrb[0].mxu0
      %v504 = vadd.f32 %v445, %v503
      %v505 = vpop.f32.mrb[0].mxu0
      %v506 = vpop.f32.mrb[0].mxu0
      %507 = vdwg.mxu0
      %v508 = vmax.f32 %v502, 0.0
      %v509 = vmax.f32 %v504, 0.0
      %v510 = vpack.c.bf16 %v508, %v508
      %v511 = vpack.c.bf16 %v509, %v509
      %v512 = vld [vmem:[%s6] sm:$0x3]
      %v513 = vld [vmem:[%s7] sm:$0xf]
      %515 = vset.pattern.permute.xlu0 0
      %516 = vperm.xlu0 %515, %v513
      %v517 = vpop.permute.xlu0 %516
      %vm519 = vcmask 15360
      %v521 = vsel %vm519, %v512, 0
      %vm523 = vcmask 1040384
      %v525 = vsel %vm523, %v510, 0
      %v528 = vsel %vm523, %v511, 0
      %530 = vmatprep.subr.bf16.mxu0 %v528
      %531 = vmatpush1.bf16.msra.mxu0 %v525
      %532 = vmatprep.subr.bf16.mxu0 0
      %533 = vmatpush1.bf16.msra.mxu0 0
      %534 = vmatprep.subr.bf16.mxu0 0
      %535 = vmatpush1.bf16.msra.mxu0 0
      %536 = vmatprep.subr.bf16.mxu0 0
      %537 = vmatpush1.bf16.msra.mxu0 0
      %538 = vmatprep.subr.bf16.mxu0 0
      %539 = vmatpush1.bf16.msra.mxu0 0
      %540 = vmatprep.subr.bf16.mxu0 0
      %541 = vmatpush1.bf16.msra.mxu0 0
      %542 = vmatprep.subr.bf16.mxu0 0
      %543 = vmatpush1.bf16.msra.mxu0 0
      %544 = vmatprep.subr.bf16.mxu0 0
      %545 = vmatpush1.bf16.msra.mxu0 0
      %546 = vmatprep.subr.bf16.mxu0 0
      %547 = vmatpush1.bf16.msra.mxu0 0
      %548 = vmatprep.subr.bf16.mxu0 0
      %549 = vmatpush1.bf16.msra.mxu0 0
      %550 = vmatprep.subr.bf16.mxu0 0
      %551 = vmatpush1.bf16.msra.mxu0 0
      %552 = vmatprep.subr.bf16.mxu0 0
      %553 = vmatpush1.bf16.msra.mxu0 0
      %554 = vmatprep.subr.bf16.mxu0 0
      %555 = vmatpush1.bf16.msra.mxu0 0
      %556 = vmatprep.subr.bf16.mxu0 0
      %557 = vmatpush1.bf16.msra.mxu0 0
      %558 = vmatprep.subr.bf16.mxu0 0
      %559 = vmatpush1.bf16.msra.mxu0 0
      %560 = vmatprep.subr.bf16.mxu0 0
      %561 = vmatpush1.bf16.msra.mxu0 0
      %562 = vmatprep.mubr.bf16.mxu0 0
      %563 = vmatmul.mubr.bf16.gmra.mrb[0].mxu0 %v521
      %v564 = vpop.f32.mrb[0].mxu0
      %v565 = vadd.f32 %v517, %v564
      %v566 = vpop.f32.mrb[0].mxu0
      %v567 = vadd.f32 %v517, %v566
      %v568 = vpop.f32.mrb[0].mxu0
      %v569 = vpop.f32.mrb[0].mxu0
      %570 = vdwg.mxu0
      %v571 = vld [vmem:[%s423] sm:$0xf]
      %573 = vset.pattern.permute.xlu0 0
      %574 = vperm.xlu0 %573, %v571
      %v575 = vpop.permute.xlu0 %574
      %v577 = vadd.f32 %v565, %v575
      %v578 = vadd.f32 %v567, %v575
      %v579 = vxor.u32 %v577, 2147483648
      %v580 = vxor.u32 %v578, 2147483648
      %v581 = vmul.f32 %v579, 1.442695
      %v582 = vpow.pop %v581
      %v583 = vmul.f32 %v580, 1.442695
      %v584 = vpow.pop %v583
      %v585 = vadd.f32 %v582, 1.0
      %v586 = vadd.f32 %v584, 1.0
      %v587 = vrcp.pop %v585
      %v588 = vmul.f32 1.0, %v587
      %v589 = vrcp.pop %v586
      %v590 = vmul.f32 1.0, %v589
      %v593 = vcombine.low %v588, %v590
      %v595 = vmul.f32 %v436, %v593
      %v596 = vsub.f32 1.0, %v588
      %v597 = vsub.f32 1.0, %v590
      %v600 = vcombine.low %v596, %v597
      %v602 = vmul.f32 %v438, %v600
      %v603 = vadd.f32 %v595, %v602
      %v605 = vcombine.high %v603, %v603
      %v607 = vpack.c.bf16 %v603, %v603
      %v608 = vpack.c.bf16 %v605, %v605
      %v611 = vcombine.low %v607, %v608
      %v613 = vunpack.c.l.s4 1983009808
      %v614 = vunpack.c.0.s8 %v613
      %v615 = vlaneseq
      %v616 = vshrl.u32 %v615, 7
      %v617 = vsub.s32 %v614, %v616
      %v618 = vrot.slane %v611, %v617
      %620 = vst [vmem:[%s432] sm:$0xf] %v618
      %s621 = smul.u32 2, %s24
      %p622 = scmp.lt.s32.totalorder %s23, 1
      %s623 = scalar_select %p622, %s23, 1
      %p624 = scmp.lt.s32.totalorder %s621, 1
      %s625 = scalar_select %p624, %s621, 1
      %s626 = smul.addr %s623, 2
      %s627 = sadd.s32 %s625, %s626
      %s628 = smul.addr %s627, 2
      %s629 = scalar_lea.vmem %s8, %s628
      // Predicated region
      $region53: #{bottleneck_iaff_forward.7} parent=51 // pred_check
        %p630 = pneg %p245
      $region54: #{bottleneck_iaff_forward.7} parent=51 // pred_check_branch
        %632 = sbr.rel (%p630) target = $region56
      $region55: #{bottleneck_iaff_forward.7} parent=51 // pred_region
        %s633 = smul.u32 2, %s24
      $region56: #{bottleneck_iaff_forward.7} parent=51 // pred_fallthru
        _
    $region52: #{bottleneck_iaff_forward.7} parent=5 // pred_fallthru
      _
    %p634 = scmp.le.s32.totalorder 2, %s14
    // Predicated region
    $region57: #{bottleneck_iaff_forward.7} parent=5 // pred_check
      %p635 = pneg %p634
    $region58: #{bottleneck_iaff_forward.7} parent=5 // pred_check_branch
      %637 = sbr.rel (%p635) target = $region60
    $region59: #{bottleneck_iaff_forward.7} parent=5 // pred_region
      %s638 = ssub.s32 %s14, 2
      // Predicated region
      $region61: #{bottleneck_iaff_forward.7} parent=59 // pred_check
        %p639 = pneg %p251
      $region62: #{bottleneck_iaff_forward.7} parent=59 // pred_check_branch
        %641 = sbr.rel (%p639) target = $region64
      $region63: #{bottleneck_iaff_forward.7} parent=59 // pred_region
        %s642 = smul.u32 2, %s26
        %p643 = scmp.lt.s32.totalorder %s25, 1
        %s644 = scalar_select %p643, %s25, 1
        %p645 = scmp.lt.s32.totalorder %s642, 1
        %s646 = scalar_select %p645, %s642, 1
        %s647 = smul.addr %s644, 2
        %s648 = sadd.s32 %s646, %s647
        %s649 = smul.addr %s648, 2
        %s650 = scalar_lea.vmem %s8, %s649
      $region64: #{bottleneck_iaff_forward.7} parent=59 // pred_fallthru
        _
    $region60: #{bottleneck_iaff_forward.7} parent=5 // pred_fallthru
      _
  $region6: #{bottleneck_iaff_forward.7} parent=0 // loop_footer
    %s18 = sadd.s32 1, %s14
  $region7: #{bottleneck_iaff_forward.7} parent=0 // loop_footer_branch
    %13 = sbr.rel target = $region3
  $region8: #{bottleneck_iaff_forward.7} parent=0 // loop_exit
    _

</llo_original>
